<compile_context>
chip_gen: v7x
topology: tpu7x:2x2x1
jax: 0.10.0
libtpu: 0.0.40
codegen_flags: <defaults>
</compile_context>

<pallas_src>
import functools

import jax
import jax.numpy as jnp
from jax import lax
from jax.experimental import pallas as pl
from jax.experimental.pallas import tpu as pltpu


def _round_up(x, m):
    return ((x + m - 1) // m) * m


def _vmem_limit_bytes():
    # v5e/v6e: 128 MiB physical -> ~64 MiB scoped; v7x: 64 MiB -> ~32 MiB.
    try:
        cap = pltpu.get_tpu_info().vmem_capacity_bytes
        return int(min(96 * 1024 * 1024, max(cap // 2, 32 * 1024 * 1024)))
    except Exception:
        return 64 * 1024 * 1024


# ----------------------------------------------------------------------------
# Fused bottleneck kernel.  Grid = (batch, row_blocks); row_blocks innermost.
# ----------------------------------------------------------------------------
def _bottleneck_kernel(x_ref, w1_ref, b1_ref, w2_ref, b2_ref, w3_ref, b3_ref,
                       o_ref, out1p_ref, *, h, w, th, front):
    # x_ref:     (H*W, Cin)          bf16 full image (same block for every rb)
    # w1_ref:    (Cin, P)            bf16, BN1 scale folded in
    # b1_ref:    (1, P)              f32 folded BN1 bias
    # w2_ref:    (9, P, P)           bf16, BN2 scale folded in (tap = kh*3+kw)
    # b2_ref:    (1, P)              f32 folded BN2 bias
    # w3_ref:    (P, Cout)           bf16, BN3 scale folded in (Cout == Cin)
    # b3_ref:    (1, Cout)           f32 folded BN3 bias
    # o_ref:     (th*W, Cout)        bf16 output rows of the current row block
    # out1p_ref: (front+H*W+back, P) bf16 scratch: conv1 output with zero halo
    #                                rows above/below the image (pad = 1 row).
    hw = h * w
    tw = th * w
    n_rb = h // th
    planes = w1_ref.shape[1]
    rb = pl.program_id(1)

    # ---- per-image prologue: conv1 (1x1) + BN1 + ReLU over the whole image -
    def conv1_prologue():
        acc1 = jnp.dot(x_ref[...], w1_ref[...],
                       preferred_element_type=jnp.float32)
        out1 = jnp.maximum(acc1 + b1_ref[...], 0.0).astype(jnp.bfloat16)
        # Zero only the halo rows; the interior is fully overwritten.
        out1p_ref[0:front, :] = jnp.zeros((front, planes), jnp.bfloat16)
        out1p_ref[front + hw:, :] = jnp.zeros(
            (out1p_ref.shape[0] - front - hw, planes), jnp.bfloat16)
        out1p_ref[front:front + hw, :] = out1

    if n_rb == 1:
        conv1_prologue()
    else:
        pl.when(rb == 0)(conv1_prologue)

    # Flat output-row offset of this row block (static when n_rb == 1).
    if n_rb == 1:
        row0 = 0
    else:
        row0 = rb * tw
        if tw % 8 == 0:
            row0 = pl.multiple_of(row0, 8)

    # ---- conv2 (3x3, pad=1) + BN2 + ReLU for this row block ----------------
    # Column-validity masks (row validity is handled by the zero halo rows).
    col = lax.broadcasted_iota(jnp.int32, (tw, 1), 0) % w
    col_mask = {-1: col >= 1, 0: None, 1: col <= (w - 2)}

    acc2 = jnp.zeros((tw, planes), jnp.float32)
    for ow in (-1, 0, 1):                                  # static unroll
        part = jnp.zeros((tw, planes), jnp.float32)
        for oh in (-1, 0, 1):
            t = (oh + 1) * 3 + (ow + 1)                    # tap = kh*3 + kw
            start = front + row0 + oh * w + ow
            tap = out1p_ref[pl.ds(start, tw), :]           # bf16, no cast
            part = part + jnp.dot(tap, w2_ref[t],
                                  preferred_element_type=jnp.float32)
        if col_mask[ow] is not None:
            part = jnp.where(col_mask[ow], part, 0.0)
        acc2 = acc2 + part
    out2 = jnp.maximum(acc2 + b2_ref[...], 0.0).astype(jnp.bfloat16)

    # ---- conv3 (1x1) + BN3 + residual add + ReLU ---------------------------
    res = x_ref[pl.ds(row0, tw), :].astype(jnp.float32)
    acc3 = jnp.dot(out2, w3_ref[...], preferred_element_type=jnp.float32)
    o_ref[...] = jnp.maximum(acc3 + b3_ref[...] + res, 0.0).astype(o_ref.dtype)


def fold_bn(gamma, beta, mean, var, eps=1e-5):
    scale = gamma / jnp.sqrt(var + eps)
    bias = beta - mean * scale
    return scale, bias


# ----------------------------------------------------------------------------
# USBottleneck forward (stride=1, downsample=None)
# ----------------------------------------------------------------------------
def us_bottleneck_forward(x_nchw, params, *, target_block_rows=512):
    n, cin, h, w = x_nchw.shape
    planes = params["conv1_w"].shape[0]
    cout = params["conv3_w"].shape[0]
    assert cin == cout == 4 * planes, (cin, planes, cout)   # downsample=None
    hw = h * w

    # Row-block size: ~target_block_rows output rows per grid step, th | h,
    # and th*w a multiple of 8 (else fall back to the whole image).
    th = max(1, min(h, max(1, target_block_rows // max(w, 1))))
    while h % th != 0:
        th -= 1
    if (th * w) % 8 != 0 and th != h:
        th = h
    tw = th * w
    n_rb = h // th

    front = _round_up(w + 1, 8)          # zero halo rows before the image
    back = _round_up(w + 1, 8)           # zero halo rows after the image
    pad_rows = front + hw + back

    # NCHW -> (N, H*W, C), transposed in bf16 to halve the relayout traffic.
    x_2d = jnp.transpose(x_nchw.astype(jnp.bfloat16), (0, 2, 3, 1))
    x_2d = x_2d.reshape(n, hw, cin)

    s1, b1 = fold_bn(*params["bn1"])
    s2, b2 = fold_bn(*params["bn2"])
    s3, b3 = fold_bn(*params["bn3"])

    # Fold BN scales into the weights (f32 fold, then bf16 for the MXU).
    w1 = (params["conv1_w"][:, :, 0, 0].T * s1[None, :]).astype(jnp.bfloat16)
    w2 = jnp.transpose(params["conv2_w"], (2, 3, 1, 0)) * s2[None, None, None, :]
    w2 = w2.reshape(9, planes, planes).astype(jnp.bfloat16)  # tap = kh*3 + kw
    w3 = (params["conv3_w"][:, :, 0, 0].T * s3[None, :]).astype(jnp.bfloat16)

    b1 = b1.reshape(1, planes).astype(jnp.float32)
    b2 = b2.reshape(1, planes).astype(jnp.float32)
    b3 = b3.reshape(1, cout).astype(jnp.float32)

    kernel = functools.partial(_bottleneck_kernel, h=h, w=w, th=th, front=front)

    out_2d = pl.pallas_call(
        kernel,
        out_shape=jax.ShapeDtypeStruct((n, hw, cout), jnp.bfloat16),
        grid_spec=pltpu.PrefetchScalarGridSpec(
            num_scalar_prefetch=0,
            grid=(n, n_rb),
            in_specs=[
                pl.BlockSpec((None, hw, cin), lambda i, r: (i, 0, 0)),
                pl.BlockSpec((cin, planes), lambda i, r: (0, 0)),
                pl.BlockSpec((1, planes), lambda i, r: (0, 0)),
                pl.BlockSpec((9, planes, planes), lambda i, r: (0, 0, 0)),
                pl.BlockSpec((1, planes), lambda i, r: (0, 0)),
                pl.BlockSpec((planes, cout), lambda i, r: (0, 0)),
                pl.BlockSpec((1, cout), lambda i, r: (0, 0)),
            ],
            out_specs=pl.BlockSpec((None, tw, cout), lambda i, r: (i, r, 0)),
            scratch_shapes=[pltpu.VMEM((pad_rows, planes), jnp.bfloat16)],
        ),
        compiler_params=pltpu.CompilerParams(
            dimension_semantics=("parallel", "arbitrary"),
            vmem_limit_bytes=_vmem_limit_bytes()),
    )(x_2d, w1, b1, w2, b2, w3, b3)

    out = out_2d.reshape(n, h, w, cout)
    # TODO(synk): keep activations NHWC/bf16 across the network to drop this
    # transpose + the final f32 cast entirely.
    return jnp.transpose(out, (0, 3, 1, 2)).astype(jnp.float32)


# ----------------------------------------------------------------------------
# Deterministic parameter construction
# ----------------------------------------------------------------------------
def make_params(key, inplanes, planes):
    ks = jax.random.split(key, 12)

    def conv_w(k, cout, cin, kh, kw):
        fan_in = cin * kh * kw
        return jax.random.normal(k, (cout, cin, kh, kw), jnp.float32) \
            * (2.0 / fan_in) ** 0.5

    def bn(k0, k1, k2, c):
        gamma = 1.0 + 0.1 * jax.random.normal(k0, (c,), jnp.float32)
        beta = 0.1 * jax.random.normal(k1, (c,), jnp.float32)
        mean = 0.1 * jax.random.normal(k2, (c,), jnp.float32)
        var = jnp.ones((c,), jnp.float32)
        return gamma, beta, mean, var

    return {
        "conv1_w": conv_w(ks[0], planes, inplanes, 1, 1),
        "bn1": bn(ks[1], ks[2], ks[3], planes),
        "conv2_w": conv_w(ks[4], planes, planes, 3, 3),
        "bn2": bn(ks[5], ks[6], ks[7], planes),
        "conv3_w": conv_w(ks[8], planes * 4, planes, 1, 1),
        "bn3": bn(ks[9], ks[10], ks[11], planes * 4),
    }


# ----------------------------------------------------------------------------
# Pure-JAX reference (lax.conv, same bf16 weights / intermediates)
# ----------------------------------------------------------------------------
def reference_forward(x_nchw, params):
    s1, bb1 = fold_bn(*params["bn1"])
    s2, bb2 = fold_bn(*params["bn2"])
    s3, bb3 = fold_bn(*params["bn3"])
    w1 = (params["conv1_w"] * s1[:, None, None, None]).astype(jnp.bfloat16)
    w2 = (params["conv2_w"] * s2[:, None, None, None]).astype(jnp.bfloat16)
    w3 = (params["conv3_w"] * s3[:, None, None, None]).astype(jnp.bfloat16)

    def conv(x, wgt, pad):
        return lax.conv_general_dilated(
            x, wgt, (1, 1), [(pad, pad), (pad, pad)],
            dimension_numbers=("NCHW", "OIHW", "NCHW"),
            preferred_element_type=jnp.float32)

    xb = x_nchw.astype(jnp.bfloat16)
    out = jnp.maximum(conv(xb, w1, 0) + bb1[None, :, None, None], 0.0)
    out = jnp.maximum(conv(out.astype(jnp.bfloat16), w2, 1)
                      + bb2[None, :, None, None], 0.0)
    out = conv(out.astype(jnp.bfloat16), w3, 0) + bb3[None, :, None, None]
    return jnp.maximum(out + xb.astype(jnp.float32), 0.0)


if __name__ == "__main__":
    key = jax.random.PRNGKey(0)
    k_x, k_p = jax.random.split(key)

    N, PLANES = 2, 32
    INPLANES = PLANES * 4          # 128; downsample=None requires this
    H = W = 8
    x = jax.random.normal(k_x, (N, INPLANES, H, W), jnp.float32)
    params = make_params(k_p, INPLANES, PLANES)

    fwd = jax.jit(functools.partial(us_bottleneck_forward, params=params))
    out = jax.block_until_ready(fwd(x))

    ref = reference_forward(x, params)
    assert out.shape == (N, INPLANES, H, W), out.shape
    # bf16 output + bf16 intermediates on both sides -> loose-ish tolerance.
    assert jnp.allclose(out, ref, rtol=2e-2, atol=5e-2), \
        float(jnp.max(jnp.abs(out - ref)))

    print("KERNEL_OK")
</pallas_src>

<mosaic_0001>
module attributes {stable_mosaic.version = 11 : i64} {
  func.func @_bottleneck_kernel(%arg0: i32, %arg1: i32, %arg2: memref<1x64x128xbf16, #tpu.memory_space<vmem>>, %arg3: memref<128x32xbf16, #tpu.memory_space<vmem>>, %arg4: memref<1x32xf32, #tpu.memory_space<vmem>>, %arg5: memref<9x32x32xbf16, #tpu.memory_space<vmem>>, %arg6: memref<1x32xf32, #tpu.memory_space<vmem>>, %arg7: memref<32x128xbf16, #tpu.memory_space<vmem>>, %arg8: memref<1x128xf32, #tpu.memory_space<vmem>>, %arg9: memref<1x64x128xbf16, #tpu.memory_space<vmem>>, %arg10: memref<96x32xbf16, #tpu.memory_space<vmem>>) attributes {dimension_semantics = [#tpu.dimension_semantics<parallel>, #tpu.dimension_semantics<arbitrary>], iteration_bounds = array<i64: 2, 1>, scalar_prefetch = 0 : i64, scratch_operands = 1 : i64, tpu.core_type = #tpu.core_type<tc>, window_params = [{transform_indices = @transform_0, window_bounds = array<i64: 1, 64, 128>}, {pipeline_mode = #tpu.pipeline_mode<synchronous>, transform_indices = @transform_1, window_bounds = array<i64: 128, 32>}, {pipeline_mode = #tpu.pipeline_mode<synchronous>, transform_indices = @transform_2, window_bounds = array<i64: 1, 32>}, {pipeline_mode = #tpu.pipeline_mode<synchronous>, transform_indices = @transform_3, window_bounds = array<i64: 9, 32, 32>}, {pipeline_mode = #tpu.pipeline_mode<synchronous>, transform_indices = @transform_4, window_bounds = array<i64: 1, 32>}, {pipeline_mode = #tpu.pipeline_mode<synchronous>, transform_indices = @transform_5, window_bounds = array<i64: 32, 128>}, {pipeline_mode = #tpu.pipeline_mode<synchronous>, transform_indices = @transform_6, window_bounds = array<i64: 1, 128>}, {transform_indices = @transform_7, window_bounds = array<i64: 1, 64, 128>}]} {
    %c0 = arith.constant 0 : index
    %c0_0 = arith.constant 0 : index
    %c0_1 = arith.constant 0 : index
    %0 = vector.load %arg2[%c0, %c0_0, %c0_1] : memref<1x64x128xbf16, #tpu.memory_space<vmem>>, vector<1x64x128xbf16>
    %1 = vector.shape_cast %0 : vector<1x64x128xbf16> to vector<64x128xbf16>
    %c0_2 = arith.constant 0 : index
    %c0_3 = arith.constant 0 : index
    %2 = vector.load %arg3[%c0_2, %c0_3] : memref<128x32xbf16, #tpu.memory_space<vmem>>, vector<128x32xbf16>
    %cst = arith.constant dense<0.000000e+00> : vector<64x32xf32>
    %3 = tpu.matmul %1, %2, %cst {dimension_numbers = #tpu.dot_dimension_numbers<[1], [0], [0], [1], [0, 0, 1, 1], [], []>} : vector<64x128xbf16>, vector<128x32xbf16>, vector<64x32xf32> -> vector<64x32xf32>
    %c0_4 = arith.constant 0 : index
    %c0_5 = arith.constant 0 : index
    %4 = vector.load %arg4[%c0_4, %c0_5] : memref<1x32xf32, #tpu.memory_space<vmem>>, vector<1x32xf32>
    %5 = vector.broadcast %4 : vector<1x32xf32> to vector<64x32xf32>
    %6 = arith.addf %3, %5 : vector<64x32xf32>
    %cst_6 = arith.constant 0.000000e+00 : f32
    %7 = vector.broadcast %cst_6 : f32 to vector<64x32xf32>
    %8 = arith.maximumf %6, %7 : vector<64x32xf32>
    %9 = arith.truncf %8 : vector<64x32xf32> to vector<64x32xbf16>
    %cst_7 = arith.constant 0.000000e+00 : bf16
    %10 = vector.broadcast %cst_7 : bf16 to vector<16x32xbf16>
    %c0_8 = arith.constant 0 : index
    %c0_9 = arith.constant 0 : index
    %11 = vector.load %arg10[%c0_8, %c0_9] : memref<96x32xbf16, #tpu.memory_space<vmem>>, vector<16x32xbf16>
    tpu.vector_store %arg10[%c0_8, %c0_9], %10 {strides = array<i32>} : memref<96x32xbf16, #tpu.memory_space<vmem>>, vector<16x32xbf16>,
    %cst_10 = arith.constant 0.000000e+00 : bf16
    %12 = vector.broadcast %cst_10 : bf16 to vector<16x32xbf16>
    %c80 = arith.constant 80 : index
    %c0_11 = arith.constant 0 : index
    %13 = vector.load %arg10[%c80, %c0_11] : memref<96x32xbf16, #tpu.memory_space<vmem>>, vector<16x32xbf16>
    tpu.vector_store %arg10[%c80, %c0_11], %12 {strides = array<i32>} : memref<96x32xbf16, #tpu.memory_space<vmem>>, vector<16x32xbf16>,
    %c16 = arith.constant 16 : index
    %c0_12 = arith.constant 0 : index
    %14 = vector.load %arg10[%c16, %c0_12] : memref<96x32xbf16, #tpu.memory_space<vmem>>, vector<64x32xbf16>
    tpu.vector_store %arg10[%c16, %c0_12], %9 {strides = array<i32>} : memref<96x32xbf16, #tpu.memory_space<vmem>>, vector<64x32xbf16>,
    %15 = tpu.iota {dimensions = array<i32: 0>} : vector<64x1xi32>
    %c8_i32 = arith.constant 8 : i32
    %c0_i32 = arith.constant 0 : i32
    %16 = arith.cmpi eq, %c8_i32, %c0_i32 : i32
    %c1_i32 = arith.constant 1 : i32
    %17 = arith.select %16, %c1_i32, %c8_i32 : i32
    %18 = vector.broadcast %17 : i32 to vector<64x1xi32>
    %19 = arith.remsi %15, %18 : vector<64x1xi32>
    %c0_i32_13 = arith.constant 0 : i32
    %20 = vector.broadcast %c0_i32_13 : i32 to vector<64x1xi32>
    %21 = arith.cmpi ne, %19, %20 : vector<64x1xi32>
    %c0_i32_14 = arith.constant 0 : i32
    %22 = vector.broadcast %c0_i32_14 : i32 to vector<64x1xi32>
    %23 = arith.cmpi slt, %19, %22 : vector<64x1xi32>
    %c0_i32_15 = arith.constant 0 : i32
    %24 = arith.cmpi slt, %17, %c0_i32_15 : i32
    %25 = vector.broadcast %24 : i1 to vector<64x1xi1>
    %26 = vector.broadcast %25 : vector<64x1xi1> to vector<64x1xi1>
    %27 = arith.xori %23, %26 : vector<64x1xi1>
    %28 = arith.andi %27, %21 : vector<64x1xi1>
    %29 = vector.broadcast %17 : i32 to vector<64x1xi32>
    %30 = arith.addi %19, %29 : vector<64x1xi32>
    %31 = arith.select %28, %30, %19 : vector<64x1xi1>, vector<64x1xi32>
    %c1_i32_16 = arith.constant 1 : i32
    %32 = vector.broadcast %c1_i32_16 : i32 to vector<64x1xi32>
    %33 = arith.cmpi sge, %31, %32 : vector<64x1xi32>
    %c6_i32 = arith.constant 6 : i32
    %34 = vector.broadcast %c6_i32 : i32 to vector<64x1xi32>
    %35 = arith.cmpi sle, %31, %34 : vector<64x1xi32>
    %cst_17 = arith.constant 0.000000e+00 : f32
    %36 = vector.broadcast %cst_17 : f32 to vector<64x32xf32>
    %cst_18 = arith.constant 0.000000e+00 : f32
    %37 = vector.broadcast %cst_18 : f32 to vector<64x32xf32>
    %c7 = arith.constant 7 : index
    %c0_19 = arith.constant 0 : index
    %38 = vector.load %arg10[%c7, %c0_19] : memref<96x32xbf16, #tpu.memory_space<vmem>>, vector<64x32xbf16>
    %c0_20 = arith.constant 0 : index
    %c0_21 = arith.constant 0 : index
    %c0_22 = arith.constant 0 : index
    %39 = vector.load %arg5[%c0_20, %c0_21, %c0_22] : memref<9x32x32xbf16, #tpu.memory_space<vmem>>, vector<1x32x32xbf16>
    %40 = vector.shape_cast %39 : vector<1x32x32xbf16> to vector<32x32xbf16>
    %cst_23 = arith.constant dense<0.000000e+00> : vector<64x32xf32>
    %41 = tpu.matmul %38, %40, %cst_23 {dimension_numbers = #tpu.dot_dimension_numbers<[1], [0], [0], [1], [0, 0, 1, 1], [], []>} : vector<64x32xbf16>, vector<32x32xbf16>, vector<64x32xf32> -> vector<64x32xf32>
    %42 = arith.addf %37, %41 : vector<64x32xf32>
    %c15 = arith.constant 15 : index
    %c0_24 = arith.constant 0 : index
    %43 = vector.load %arg10[%c15, %c0_24] : memref<96x32xbf16, #tpu.memory_space<vmem>>, vector<64x32xbf16>
    %c3 = arith.constant 3 : index
    %c0_25 = arith.constant 0 : index
    %c0_26 = arith.constant 0 : index
    %44 = vector.load %arg5[%c3, %c0_25, %c0_26] : memref<9x32x32xbf16, #tpu.memory_space<vmem>>, vector<1x32x32xbf16>
    %45 = vector.shape_cast %44 : vector<1x32x32xbf16> to vector<32x32xbf16>
    %cst_27 = arith.constant dense<0.000000e+00> : vector<64x32xf32>
    %46 = tpu.matmul %43, %45, %cst_27 {dimension_numbers = #tpu.dot_dimension_numbers<[1], [0], [0], [1], [0, 0, 1, 1], [], []>} : vector<64x32xbf16>, vector<32x32xbf16>, vector<64x32xf32> -> vector<64x32xf32>
    %47 = arith.addf %42, %46 : vector<64x32xf32>
    %c23 = arith.constant 23 : index
    %c0_28 = arith.constant 0 : index
    %48 = vector.load %arg10[%c23, %c0_28] : memref<96x32xbf16, #tpu.memory_space<vmem>>, vector<64x32xbf16>
    %c6 = arith.constant 6 : index
    %c0_29 = arith.constant 0 : index
    %c0_30 = arith.constant 0 : index
    %49 = vector.load %arg5[%c6, %c0_29, %c0_30] : memref<9x32x32xbf16, #tpu.memory_space<vmem>>, vector<1x32x32xbf16>
    %50 = vector.shape_cast %49 : vector<1x32x32xbf16> to vector<32x32xbf16>
    %cst_31 = arith.constant dense<0.000000e+00> : vector<64x32xf32>
    %51 = tpu.matmul %48, %50, %cst_31 {dimension_numbers = #tpu.dot_dimension_numbers<[1], [0], [0], [1], [0, 0, 1, 1], [], []>} : vector<64x32xbf16>, vector<32x32xbf16>, vector<64x32xf32> -> vector<64x32xf32>
    %52 = arith.addf %47, %51 : vector<64x32xf32>
    %cst_32 = arith.constant 0.000000e+00 : f32
    %53 = vector.shape_cast %33 : vector<64x1xi1> to vector<64x1xi1>
    %54 = vector.broadcast %53 : vector<64x1xi1> to vector<64x32xi1>
    %55 = vector.broadcast %cst_32 : f32 to vector<64x32xf32>
    %56 = arith.select %54, %52, %55 : vector<64x32xi1>, vector<64x32xf32>
    %57 = arith.addf %36, %56 : vector<64x32xf32>
    %cst_33 = arith.constant 0.000000e+00 : f32
    %58 = vector.broadcast %cst_33 : f32 to vector<64x32xf32>
    %c8 = arith.constant 8 : index
    %c0_34 = arith.constant 0 : index
    %59 = vector.load %arg10[%c8, %c0_34] : memref<96x32xbf16, #tpu.memory_space<vmem>>, vector<64x32xbf16>
    %c1 = arith.constant 1 : index
    %c0_35 = arith.constant 0 : index
    %c0_36 = arith.constant 0 : index
    %60 = vector.load %arg5[%c1, %c0_35, %c0_36] : memref<9x32x32xbf16, #tpu.memory_space<vmem>>, vector<1x32x32xbf16>
    %61 = vector.shape_cast %60 : vector<1x32x32xbf16> to vector<32x32xbf16>
    %cst_37 = arith.constant dense<0.000000e+00> : vector<64x32xf32>
    %62 = tpu.matmul %59, %61, %cst_37 {dimension_numbers = #tpu.dot_dimension_numbers<[1], [0], [0], [1], [0, 0, 1, 1], [], []>} : vector<64x32xbf16>, vector<32x32xbf16>, vector<64x32xf32> -> vector<64x32xf32>
    %63 = arith.addf %58, %62 : vector<64x32xf32>
    %c16_38 = arith.constant 16 : index
    %c0_39 = arith.constant 0 : index
    %64 = vector.load %arg10[%c16_38, %c0_39] : memref<96x32xbf16, #tpu.memory_space<vmem>>, vector<64x32xbf16>
    %c4 = arith.constant 4 : index
    %c0_40 = arith.constant 0 : index
    %c0_41 = arith.constant 0 : index
    %65 = vector.load %arg5[%c4, %c0_40, %c0_41] : memref<9x32x32xbf16, #tpu.memory_space<vmem>>, vector<1x32x32xbf16>
    %66 = vector.shape_cast %65 : vector<1x32x32xbf16> to vector<32x32xbf16>
    %cst_42 = arith.constant dense<0.000000e+00> : vector<64x32xf32>
    %67 = tpu.matmul %64, %66, %cst_42 {dimension_numbers = #tpu.dot_dimension_numbers<[1], [0], [0], [1], [0, 0, 1, 1], [], []>} : vector<64x32xbf16>, vector<32x32xbf16>, vector<64x32xf32> -> vector<64x32xf32>
    %68 = arith.addf %63, %67 : vector<64x32xf32>
    %c24 = arith.constant 24 : index
    %c0_43 = arith.constant 0 : index
    %69 = vector.load %arg10[%c24, %c0_43] : memref<96x32xbf16, #tpu.memory_space<vmem>>, vector<64x32xbf16>
    %c7_44 = arith.constant 7 : index
    %c0_45 = arith.constant 0 : index
    %c0_46 = arith.constant 0 : index
    %70 = vector.load %arg5[%c7_44, %c0_45, %c0_46] : memref<9x32x32xbf16, #tpu.memory_space<vmem>>, vector<1x32x32xbf16>
    %71 = vector.shape_cast %70 : vector<1x32x32xbf16> to vector<32x32xbf16>
    %cst_47 = arith.constant dense<0.000000e+00> : vector<64x32xf32>
    %72 = tpu.matmul %69, %71, %cst_47 {dimension_numbers = #tpu.dot_dimension_numbers<[1], [0], [0], [1], [0, 0, 1, 1], [], []>} : vector<64x32xbf16>, vector<32x32xbf16>, vector<64x32xf32> -> vector<64x32xf32>
    %73 = arith.addf %68, %72 : vector<64x32xf32>
    %74 = arith.addf %57, %73 : vector<64x32xf32>
    %cst_48 = arith.constant 0.000000e+00 : f32
    %75 = vector.broadcast %cst_48 : f32 to vector<64x32xf32>
    %c9 = arith.constant 9 : index
    %c0_49 = arith.constant 0 : index
    %76 = vector.load %arg10[%c9, %c0_49] : memref<96x32xbf16, #tpu.memory_space<vmem>>, vector<64x32xbf16>
    %c2 = arith.constant 2 : index
    %c0_50 = arith.constant 0 : index
    %c0_51 = arith.constant 0 : index
    %77 = vector.load %arg5[%c2, %c0_50, %c0_51] : memref<9x32x32xbf16, #tpu.memory_space<vmem>>, vector<1x32x32xbf16>
    %78 = vector.shape_cast %77 : vector<1x32x32xbf16> to vector<32x32xbf16>
    %cst_52 = arith.constant dense<0.000000e+00> : vector<64x32xf32>
    %79 = tpu.matmul %76, %78, %cst_52 {dimension_numbers = #tpu.dot_dimension_numbers<[1], [0], [0], [1], [0, 0, 1, 1], [], []>} : vector<64x32xbf16>, vector<32x32xbf16>, vector<64x32xf32> -> vector<64x32xf32>
    %80 = arith.addf %75, %79 : vector<64x32xf32>
    %c17 = arith.constant 17 : index
    %c0_53 = arith.constant 0 : index
    %81 = vector.load %arg10[%c17, %c0_53] : memref<96x32xbf16, #tpu.memory_space<vmem>>, vector<64x32xbf16>
    %c5 = arith.constant 5 : index
    %c0_54 = arith.constant 0 : index
    %c0_55 = arith.constant 0 : index
    %82 = vector.load %arg5[%c5, %c0_54, %c0_55] : memref<9x32x32xbf16, #tpu.memory_space<vmem>>, vector<1x32x32xbf16>
    %83 = vector.shape_cast %82 : vector<1x32x32xbf16> to vector<32x32xbf16>
    %cst_56 = arith.constant dense<0.000000e+00> : vector<64x32xf32>
    %84 = tpu.matmul %81, %83, %cst_56 {dimension_numbers = #tpu.dot_dimension_numbers<[1], [0], [0], [1], [0, 0, 1, 1], [], []>} : vector<64x32xbf16>, vector<32x32xbf16>, vector<64x32xf32> -> vector<64x32xf32>
    %85 = arith.addf %80, %84 : vector<64x32xf32>
    %c25 = arith.constant 25 : index
    %c0_57 = arith.constant 0 : index
    %86 = vector.load %arg10[%c25, %c0_57] : memref<96x32xbf16, #tpu.memory_space<vmem>>, vector<64x32xbf16>
    %c8_58 = arith.constant 8 : index
    %c0_59 = arith.constant 0 : index
    %c0_60 = arith.constant 0 : index
    %87 = vector.load %arg5[%c8_58, %c0_59, %c0_60] : memref<9x32x32xbf16, #tpu.memory_space<vmem>>, vector<1x32x32xbf16>
    %88 = vector.shape_cast %87 : vector<1x32x32xbf16> to vector<32x32xbf16>
    %cst_61 = arith.constant dense<0.000000e+00> : vector<64x32xf32>
    %89 = tpu.matmul %86, %88, %cst_61 {dimension_numbers = #tpu.dot_dimension_numbers<[1], [0], [0], [1], [0, 0, 1, 1], [], []>} : vector<64x32xbf16>, vector<32x32xbf16>, vector<64x32xf32> -> vector<64x32xf32>
    %90 = arith.addf %85, %89 : vector<64x32xf32>
    %cst_62 = arith.constant 0.000000e+00 : f32
    %91 = vector.shape_cast %35 : vector<64x1xi1> to vector<64x1xi1>
    %92 = vector.broadcast %91 : vector<64x1xi1> to vector<64x32xi1>
    %93 = vector.broadcast %cst_62 : f32 to vector<64x32xf32>
    %94 = arith.select %92, %90, %93 : vector<64x32xi1>, vector<64x32xf32>
    %95 = arith.addf %74, %94 : vector<64x32xf32>
    %c0_63 = arith.constant 0 : index
    %c0_64 = arith.constant 0 : index
    %96 = vector.load %arg6[%c0_63, %c0_64] : memref<1x32xf32, #tpu.memory_space<vmem>>, vector<1x32xf32>
    %97 = vector.broadcast %96 : vector<1x32xf32> to vector<64x32xf32>
    %98 = arith.addf %95, %97 : vector<64x32xf32>
    %cst_65 = arith.constant 0.000000e+00 : f32
    %99 = vector.broadcast %cst_65 : f32 to vector<64x32xf32>
    %100 = arith.maximumf %98, %99 : vector<64x32xf32>
    %101 = arith.truncf %100 : vector<64x32xf32> to vector<64x32xbf16>
    %c0_66 = arith.constant 0 : index
    %c0_67 = arith.constant 0 : index
    %c0_68 = arith.constant 0 : index
    %102 = vector.load %arg2[%c0_66, %c0_67, %c0_68] : memref<1x64x128xbf16, #tpu.memory_space<vmem>>, vector<1x64x128xbf16>
    %103 = vector.shape_cast %102 : vector<1x64x128xbf16> to vector<64x128xbf16>
    %104 = arith.extf %103 : vector<64x128xbf16> to vector<64x128xf32>
    %c0_69 = arith.constant 0 : index
    %c0_70 = arith.constant 0 : index
    %105 = vector.load %arg7[%c0_69, %c0_70] : memref<32x128xbf16, #tpu.memory_space<vmem>>, vector<32x128xbf16>
    %cst_71 = arith.constant dense<0.000000e+00> : vector<64x128xf32>
    %106 = tpu.matmul %101, %105, %cst_71 {dimension_numbers = #tpu.dot_dimension_numbers<[1], [0], [0], [1], [0, 0, 1, 1], [], []>} : vector<64x32xbf16>, vector<32x128xbf16>, vector<64x128xf32> -> vector<64x128xf32>
    %c0_72 = arith.constant 0 : index
    %c0_73 = arith.constant 0 : index
    %107 = vector.load %arg8[%c0_72, %c0_73] : memref<1x128xf32, #tpu.memory_space<vmem>>, vector<1x128xf32>
    %108 = vector.broadcast %107 : vector<1x128xf32> to vector<64x128xf32>
    %109 = arith.addf %106, %108 : vector<64x128xf32>
    %110 = arith.addf %109, %104 : vector<64x128xf32>
    %cst_74 = arith.constant 0.000000e+00 : f32
    %111 = vector.broadcast %cst_74 : f32 to vector<64x128xf32>
    %112 = arith.maximumf %110, %111 : vector<64x128xf32>
    %113 = arith.truncf %112 : vector<64x128xf32> to vector<64x128xbf16>
    %c0_75 = arith.constant 0 : index
    %c0_76 = arith.constant 0 : index
    %c0_77 = arith.constant 0 : index
    %114 = vector.load %arg9[%c0_75, %c0_76, %c0_77] : memref<1x64x128xbf16, #tpu.memory_space<vmem>>, vector<1x64x128xbf16>
    %115 = vector.shape_cast %114 : vector<1x64x128xbf16> to vector<64x128xbf16>
    %116 = vector.shape_cast %113 : vector<64x128xbf16> to vector<1x64x128xbf16>
    tpu.vector_store %arg9[%c0_75, %c0_76, %c0_77], %116 {strides = array<i32>} : memref<1x64x128xbf16, #tpu.memory_space<vmem>>, vector<1x64x128xbf16>,
    return
  }
  func.func @transform_0(%arg0: i32, %arg1: i32) -> (i32, i32, i32) {
    %c0_i32 = arith.constant 0 : i32
    %c0_i32_0 = arith.constant 0 : i32
    %c0_i32_1 = arith.constant 0 : i32
    return %arg0, %c0_i32, %c0_i32_0 : i32, i32, i32
  }
  func.func @transform_1(%arg0: i32, %arg1: i32) -> (i32, i32) {
    %c0_i32 = arith.constant 0 : i32
    %c0_i32_0 = arith.constant 0 : i32
    %c0_i32_1 = arith.constant 0 : i32
    return %c0_i32, %c0_i32_0 : i32, i32
  }
  func.func @transform_2(%arg0: i32, %arg1: i32) -> (i32, i32) {
    %c0_i32 = arith.constant 0 : i32
    %c0_i32_0 = arith.constant 0 : i32
    %c0_i32_1 = arith.constant 0 : i32
    return %c0_i32, %c0_i32_0 : i32, i32
  }
  func.func @transform_3(%arg0: i32, %arg1: i32) -> (i32, i32, i32) {
    %c0_i32 = arith.constant 0 : i32
    %c0_i32_0 = arith.constant 0 : i32
    %c0_i32_1 = arith.constant 0 : i32
    %c0_i32_2 = arith.constant 0 : i32
    return %c0_i32, %c0_i32_0, %c0_i32_1 : i32, i32, i32
  }
  func.func @transform_4(%arg0: i32, %arg1: i32) -> (i32, i32) {
    %c0_i32 = arith.constant 0 : i32
    %c0_i32_0 = arith.constant 0 : i32
    %c0_i32_1 = arith.constant 0 : i32
    return %c0_i32, %c0_i32_0 : i32, i32
  }
  func.func @transform_5(%arg0: i32, %arg1: i32) -> (i32, i32) {
    %c0_i32 = arith.constant 0 : i32
    %c0_i32_0 = arith.constant 0 : i32
    %c0_i32_1 = arith.constant 0 : i32
    return %c0_i32, %c0_i32_0 : i32, i32
  }
  func.func @transform_6(%arg0: i32, %arg1: i32) -> (i32, i32) {
    %c0_i32 = arith.constant 0 : i32
    %c0_i32_0 = arith.constant 0 : i32
    %c0_i32_1 = arith.constant 0 : i32
    return %c0_i32, %c0_i32_0 : i32, i32
  }
  func.func @transform_7(%arg0: i32, %arg1: i32) -> (i32, i32, i32) {
    %c0_i32 = arith.constant 0 : i32
    %c0_i32_0 = arith.constant 0 : i32
    return %arg0, %arg1, %c0_i32 : i32, i32, i32
  }
}

</mosaic_0001>

<llo_original>
// kernel: us_bottleneck_forward.1
$region0: #{us_bottleneck_forward.1}
  #allocation0 [shape = 'u32[]', space=smem, size = 0x4, offset = 0x4, fixed_abs, tag = 'smem constant byte address 0x4 - core index']
  #allocation1 [shape = 'u32[144,128]{1,0:T(1,128)}', space=vmem, size = 0x12000, scoped, tag = 'internal scratch']
  #allocation2 [shape = 'bf16[96,32]{1,0:T(16,128)(2,1)}', space=vmem, size = 0x6000, scoped, tag = 'scratch operand']
  %s0 = inlined_call_operand.hbm [shape: bf16[2,64,128], index: 0, kind: input, shape index: {}]
  %s1 = inlined_call_operand.hbm [shape: bf16[128,32], index: 1, kind: input, shape index: {}]
  %s2 = inlined_call_operand.hbm [shape: f32[1,32], index: 2, kind: input, shape index: {}]
  %s3 = inlined_call_operand.hbm [shape: bf16[9,32,32], index: 3, kind: input, shape index: {}]
  %s4 = inlined_call_operand.hbm [shape: f32[1,32], index: 4, kind: input, shape index: {}]
  %s5 = inlined_call_operand.hbm [shape: bf16[32,128], index: 5, kind: input, shape index: {}]
  %s6 = inlined_call_operand.hbm [shape: f32[1,128], index: 6, kind: input, shape index: {}]
  %s7 = inlined_call_operand.hbm [shape: bf16[2,64,128], index: 7, kind: output, shape index: {}]
  %s8 = sld [smem:[#allocation0]]
  $region89: #{us_bottleneck_forward.1} parent=0
    _
  %s10 = ssub.s32 1, %s8
  %s11 = scalar_select 0, %s10, %s8
  $region1: #{us_bottleneck_forward.1} parent=0
    #allocation3 [shape = 'u8[32768]{0}', space=vmem, size = 0x8000, scoped, tag = 'input window, operand 0']
    #allocation4 [shape = 's32[2]{0}', space=sflag, size = 0x8, scoped, tag = 'scoped memory for us_bottleneck_forward.1']
    #allocation5 [shape = 's32[2]{0}', space=sflag, size = 0x8, scoped, tag = 'scoped memory for us_bottleneck_forward.1']
    #allocation6 [shape = 'u8[32768]{0}', space=vmem, size = 0x8000, scoped, tag = 'input window, operand 1, single buffered']
    #allocation7 [shape = 's32[1]{0}', space=sflag, size = 0x4, scoped, tag = 'scoped memory for us_bottleneck_forward.1']
    #allocation8 [shape = 'u8[512]{0}', space=vmem, size = 0x400, scoped, tag = 'input window, operand 2, single buffered']
    #allocation9 [shape = 'u8[73728]{0}', space=vmem, size = 0x12000, scoped, tag = 'input window, operand 3, single buffered']
    #allocation10 [shape = 's32[1]{0}', space=sflag, size = 0x4, scoped, tag = 'scoped memory for us_bottleneck_forward.1']
    #allocation11 [shape = 'u8[512]{0}', space=vmem, size = 0x400, scoped, tag = 'input window, operand 4, single buffered']
    #allocation12 [shape = 'u8[8192]{0}', space=vmem, size = 0x2000, scoped, tag = 'input window, operand 5, single buffered']
    #allocation13 [shape = 's32[1]{0}', space=sflag, size = 0x4, scoped, tag = 'scoped memory for us_bottleneck_forward.1']
    #allocation14 [shape = 'u8[512]{0}', space=vmem, size = 0x400, scoped, tag = 'input window, operand 6, single buffered']
    #allocation15 [shape = 'u8[32768]{0}', space=vmem, size = 0x8000, scoped, tag = 'output window, operand 0']
    %12 = vsyncpa [#allocation4], 0
    %s13 = scalar_lea.sflag [#allocation4], 1
    %14 = vsyncpa %s13, 0
    %15 = vsyncpa [#allocation7], 0
    %16 = vsyncpa [#allocation10], 0
    %17 = vsyncpa [#allocation13], 0
    %18 = vsyncpa [#allocation5], 0
    %s19 = scalar_lea.sflag [#allocation5], 1
    %20 = vsyncpa %s19, 0
    loop: start=0, step=1, limit=4
    $region2: #{us_bottleneck_forward.1} parent=1 // loop_pre_header
      _
    $region3: #{us_bottleneck_forward.1} parent=1 // loop_header
      %s22 = sphi 0, %s26
      %p23 = scmp.ge.s32.totalorder %s22, 4
      %s29 = sphi 0, %s41
      %s30 = sphi 0, %s37
      %s31 = sphi 0, %s29
      %s32 = sphi 0, %s30
      %s33 = sphi 0, %s31
      %s34 = sphi 0, %s32
      %s44 = sphi 0, %s46
      %s47 = sphi 0, %s44
      %s48 = sphi 0, %s47
      %s64 = sphi 0, %s48
      %s68 = sphi 0, %s68
      %s70 = sphi 0, %s68
      %s71 = sphi 0, %s70
      %s85 = sphi 0, %s71
      %s89 = sphi 0, %s89
      %s91 = sphi 0, %s89
      %s92 = sphi 0, %s91
      %s106 = sphi 0, %s92
      %s110 = sphi 0, %s110
      %s112 = sphi 0, %s110
      %s113 = sphi 0, %s112
      %s127 = sphi 0, %s113
      %s131 = sphi 0, %s131
      %s133 = sphi 0, %s131
      %s134 = sphi 0, %s133
      %s148 = sphi 0, %s134
      %s152 = sphi 0, %s152
      %s154 = sphi 0, %s152
      %s155 = sphi 0, %s154
      %s169 = sphi 0, %s155
      %s173 = sphi 0, %s173
      %s175 = sphi 0, %s173
      %s176 = sphi 0, %s175
      %s190 = sphi 0, %s176
      %s198 = sphi 0, %s200
      %s201 = sphi 0, %s198
      %s202 = sphi 0, %s201
      %s218 = sphi 0, %s202
    $region4: #{us_bottleneck_forward.1} parent=1 // loop_header_branch
      %25 = sbr.rel (%p23) target = $region8
    $region5: #{us_bottleneck_forward.1} parent=1 // loop_body
      %s27 = ssub.s32 %s22, 1
      %s28 = ssub.s32 %s22, 2
      %s35 = sadd.s32 1, %s30
      %p36 = scmp.ge.s32.totalorder %s35, 1
      %s37 = scalar_select %p36, 0, %s35
      %s38 = sadd.s32 1, %s29
      %s39 = scalar_select %p36, %s38, %s29
      %p40 = scmp.ge.s32.totalorder %s39, 2
      %s41 = scalar_select %p40, 0, %s39
      %s42 = ssub.s32 %s29, %s41
      %p43 = scmp.eq.s32.totalorder %s42, 0
      %s45 = sadd.s32 %s44, 1
      %s46 = scalar_select %p43, %s44, %s45
      %p49 = pneg %p43
      %p50 = scmp.eq.s32.totalorder %s22, 1
      %p51 = por %p49, %p50
      %p52 = scmp.ne.s32.totalorder %s44, %s47
      %p53 = scmp.eq.s32.totalorder %s22, 0
      %p54 = por %p52, %p53
      %p55 = scmp.ne.s32.totalorder %s44, %s47
      %p56 = scmp.eq.s32.totalorder %s27, 1
      %p57 = por %p55, %p56
      %p58 = scmp.ne.s32.totalorder %s47, %s48
      %p59 = scmp.eq.s32.totalorder %s27, 0
      %p60 = por %p58, %p59
      %p61 = scmp.ne.s32.totalorder %s47, %s48
      %p62 = scmp.eq.s32.totalorder %s28, 1
      %p63 = por %p61, %p62
      %p65 = scmp.ne.s32.totalorder %s48, %s64
      %p66 = scmp.eq.s32.totalorder %s28, 0
      %p67 = por %p65, %p66
      %s69 = sadd.s32 %s68, 1
      %p72 = scmp.eq.s32.totalorder %s22, 1
      %p73 = scmp.ne.s32.totalorder %s68, %s70
      %p74 = scmp.eq.s32.totalorder %s22, 0
      %p75 = por %p73, %p74
      %p76 = scmp.ne.s32.totalorder %s68, %s70
      %p77 = scmp.eq.s32.totalorder %s27, 1
      %p78 = por %p76, %p77
      %p79 = scmp.ne.s32.totalorder %s70, %s71
      %p80 = scmp.eq.s32.totalorder %s27, 0
      %p81 = por %p79, %p80
      %p82 = scmp.ne.s32.totalorder %s70, %s71
      %p83 = scmp.eq.s32.totalorder %s28, 1
      %p84 = por %p82, %p83
      %p86 = scmp.ne.s32.totalorder %s71, %s85
      %p87 = scmp.eq.s32.totalorder %s28, 0
      %p88 = por %p86, %p87
      %s90 = sadd.s32 %s89, 1
      %p93 = scmp.eq.s32.totalorder %s22, 1
      %p94 = scmp.ne.s32.totalorder %s89, %s91
      %p95 = scmp.eq.s32.totalorder %s22, 0
      %p96 = por %p94, %p95
      %p97 = scmp.ne.s32.totalorder %s89, %s91
      %p98 = scmp.eq.s32.totalorder %s27, 1
      %p99 = por %p97, %p98
      %p100 = scmp.ne.s32.totalorder %s91, %s92
      %p101 = scmp.eq.s32.totalorder %s27, 0
      %p102 = por %p100, %p101
      %p103 = scmp.ne.s32.totalorder %s91, %s92
      %p104 = scmp.eq.s32.totalorder %s28, 1
      %p105 = por %p103, %p104
      %p107 = scmp.ne.s32.totalorder %s92, %s106
      %p108 = scmp.eq.s32.totalorder %s28, 0
      %p109 = por %p107, %p108
      %s111 = sadd.s32 %s110, 1
      %p114 = scmp.eq.s32.totalorder %s22, 1
      %p115 = scmp.ne.s32.totalorder %s110, %s112
      %p116 = scmp.eq.s32.totalorder %s22, 0
      %p117 = por %p115, %p116
      %p118 = scmp.ne.s32.totalorder %s110, %s112
      %p119 = scmp.eq.s32.totalorder %s27, 1
      %p120 = por %p118, %p119
      %p121 = scmp.ne.s32.totalorder %s112, %s113
      %p122 = scmp.eq.s32.totalorder %s27, 0
      %p123 = por %p121, %p122
      %p124 = scmp.ne.s32.totalorder %s112, %s113
      %p125 = scmp.eq.s32.totalorder %s28, 1
      %p126 = por %p124, %p125
      %p128 = scmp.ne.s32.totalorder %s113, %s127
      %p129 = scmp.eq.s32.totalorder %s28, 0
      %p130 = por %p128, %p129
      %s132 = sadd.s32 %s131, 1
      %p135 = scmp.eq.s32.totalorder %s22, 1
      %p136 = scmp.ne.s32.totalorder %s131, %s133
      %p137 = scmp.eq.s32.totalorder %s22, 0
      %p138 = por %p136, %p137
      %p139 = scmp.ne.s32.totalorder %s131, %s133
      %p140 = scmp.eq.s32.totalorder %s27, 1
      %p141 = por %p139, %p140
      %p142 = scmp.ne.s32.totalorder %s133, %s134
      %p143 = scmp.eq.s32.totalorder %s27, 0
      %p144 = por %p142, %p143
      %p145 = scmp.ne.s32.totalorder %s133, %s134
      %p146 = scmp.eq.s32.totalorder %s28, 1
      %p147 = por %p145, %p146
      %p149 = scmp.ne.s32.totalorder %s134, %s148
      %p150 = scmp.eq.s32.totalorder %s28, 0
      %p151 = por %p149, %p150
      %s153 = sadd.s32 %s152, 1
      %p156 = scmp.eq.s32.totalorder %s22, 1
      %p157 = scmp.ne.s32.totalorder %s152, %s154
      %p158 = scmp.eq.s32.totalorder %s22, 0
      %p159 = por %p157, %p158
      %p160 = scmp.ne.s32.totalorder %s152, %s154
      %p161 = scmp.eq.s32.totalorder %s27, 1
      %p162 = por %p160, %p161
      %p163 = scmp.ne.s32.totalorder %s154, %s155
      %p164 = scmp.eq.s32.totalorder %s27, 0
      %p165 = por %p163, %p164
      %p166 = scmp.ne.s32.totalorder %s154, %s155
      %p167 = scmp.eq.s32.totalorder %s28, 1
      %p168 = por %p166, %p167
      %p170 = scmp.ne.s32.totalorder %s155, %s169
      %p171 = scmp.eq.s32.totalorder %s28, 0
      %p172 = por %p170, %p171
      %s174 = sadd.s32 %s173, 1
      %p177 = scmp.eq.s32.totalorder %s22, 1
      %p178 = scmp.ne.s32.totalorder %s173, %s175
      %p179 = scmp.eq.s32.totalorder %s22, 0
      %p180 = por %p178, %p179
      %p181 = scmp.ne.s32.totalorder %s173, %s175
      %p182 = scmp.eq.s32.totalorder %s27, 1
      %p183 = por %p181, %p182
      %p184 = scmp.ne.s32.totalorder %s175, %s176
      %p185 = scmp.eq.s32.totalorder %s27, 0
      %p186 = por %p184, %p185
      %p187 = scmp.ne.s32.totalorder %s175, %s176
      %p188 = scmp.eq.s32.totalorder %s28, 1
      %p189 = por %p187, %p188
      %p191 = scmp.ne.s32.totalorder %s176, %s190
      %p192 = scmp.eq.s32.totalorder %s28, 0
      %p193 = por %p191, %p192
      %s194 = ssub.s32 %s29, %s41
      %s195 = ssub.s32 %s30, %s37
      %s196 = sor.u32 %s194, %s195
      %p197 = scmp.eq.s32.totalorder %s196, 0
      %s199 = sadd.s32 %s198, 1
      %s200 = scalar_select %p197, %s198, %s199
      %p203 = pneg %p197
      %p204 = scmp.eq.s32.totalorder %s22, 1
      %p205 = por %p203, %p204
      %p206 = scmp.ne.s32.totalorder %s198, %s201
      %p207 = scmp.eq.s32.totalorder %s22, 0
      %p208 = por %p206, %p207
      %p209 = scmp.ne.s32.totalorder %s198, %s201
      %p210 = scmp.eq.s32.totalorder %s27, 1
      %p211 = por %p209, %p210
      %p212 = scmp.ne.s32.totalorder %s201, %s202
      %p213 = scmp.eq.s32.totalorder %s27, 0
      %p214 = por %p212, %p213
      %p215 = scmp.ne.s32.totalorder %s201, %s202
      %p216 = scmp.eq.s32.totalorder %s28, 1
      %p217 = por %p215, %p216
      %p219 = scmp.ne.s32.totalorder %s202, %s218
      %p220 = scmp.eq.s32.totalorder %s28, 0
      %p221 = por %p219, %p220
      %p222 = scmp.le.s32.totalorder 1, %s22
      %p223 = scmp.lt.s32.totalorder %s22, 3
      %p224 = pnand %p222, %p223
      %p225 = pneg %p224
      // Predicated region
      $region9: #{us_bottleneck_forward.1} parent=5 // pred_check
        _
      $region10: #{us_bottleneck_forward.1} parent=5 // pred_check_branch
        %227 = sbr.rel (%p224) target = $region12
      $region11: #{us_bottleneck_forward.1} parent=5 // pred_region
        %s228 = ssub.s32 %s22, 1
        // Predicated region
        $region13: #{us_bottleneck_forward.1} parent=11 // pred_check
          %p229 = pneg %p81
        $region14: #{us_bottleneck_forward.1} parent=11 // pred_check_branch
          %231 = sbr.rel (%p229) target = $region16
        $region15: #{us_bottleneck_forward.1} parent=11 // pred_region
          %s233 = ssub.s32 1024, 1024
          %234 = vsyncadd [#allocation7], %s233
          %s235 = sshll.u32 [#allocation6], 4
          %s236 = int_to_ptr.vmem [resolvable:$true] %s235
          %241 = dma.hbm_to_vmem [thread:$0]  %s1, 1024, %s236, [#allocation7], 64, 64, 4
        $region16: #{us_bottleneck_forward.1} parent=11 // pred_fallthru
          _
        // Predicated region
        $region17: #{us_bottleneck_forward.1} parent=11 // pred_check
          %p242 = pneg %p102
        $region18: #{us_bottleneck_forward.1} parent=11 // pred_check_branch
          %244 = sbr.rel (%p242) target = $region20
        $region19: #{us_bottleneck_forward.1} parent=11 // pred_region
          %s246 = ssub.s32 16, 16
          %247 = vsyncadd [#allocation7], %s246
          %s249 = sshll.u32 [#allocation8], 4
          %s250 = int_to_ptr.vmem [resolvable:$true] %s249
          %252 = dma.hbm_to_vmem [thread:$0]  %s2, 16, %s250, [#allocation7]
        $region20: #{us_bottleneck_forward.1} parent=11 // pred_fallthru
          _
        // Predicated region
        $region21: #{us_bottleneck_forward.1} parent=11 // pred_check
          %p253 = pneg %p123
        $region22: #{us_bottleneck_forward.1} parent=11 // pred_check_branch
          %255 = sbr.rel (%p253) target = $region24
        $region23: #{us_bottleneck_forward.1} parent=11 // pred_region
          %s257 = ssub.s32 2304, 2304
          %258 = vsyncadd [#allocation10], %s257
          %s259 = sshll.u32 [#allocation9], 4
          %s260 = int_to_ptr.vmem [resolvable:$true] %s259
          %265 = dma.hbm_to_vmem [thread:$0]  %s3, 2304, %s260, [#allocation10], 64, 64, 4
        $region24: #{us_bottleneck_forward.1} parent=11 // pred_fallthru
          _
        // Predicated region
        $region25: #{us_bottleneck_forward.1} parent=11 // pred_check
          %p266 = pneg %p144
        $region26: #{us_bottleneck_forward.1} parent=11 // pred_check_branch
          %268 = sbr.rel (%p266) target = $region28
        $region27: #{us_bottleneck_forward.1} parent=11 // pred_region
          %s270 = ssub.s32 16, 16
          %271 = vsyncadd [#allocation10], %s270
          %s273 = sshll.u32 [#allocation11], 4
          %s274 = int_to_ptr.vmem [resolvable:$true] %s273
          %276 = dma.hbm_to_vmem [thread:$0]  %s4, 16, %s274, [#allocation10]
        $region28: #{us_bottleneck_forward.1} parent=11 // pred_fallthru
          _
        // Predicated region
        $region29: #{us_bottleneck_forward.1} parent=11 // pred_check
          %p277 = pneg %p165
        $region30: #{us_bottleneck_forward.1} parent=11 // pred_check_branch
          %279 = sbr.rel (%p277) target = $region32
        $region31: #{us_bottleneck_forward.1} parent=11 // pred_region
          %s281 = ssub.s32 256, 256
          %282 = vsyncadd [#allocation13], %s281
          %s283 = sshll.u32 [#allocation12], 4
          %s284 = int_to_ptr.vmem [resolvable:$true] %s283
          %289 = dma.hbm_to_vmem [thread:$0]  %s5, 256, %s284, [#allocation13], 64, 64, 4
        $region32: #{us_bottleneck_forward.1} parent=11 // pred_fallthru
          _
        // Predicated region
        $region33: #{us_bottleneck_forward.1} parent=11 // pred_check
          %p290 = pneg %p186
        $region34: #{us_bottleneck_forward.1} parent=11 // pred_check_branch
          %292 = sbr.rel (%p290) target = $region36
        $region35: #{us_bottleneck_forward.1} parent=11 // pred_region
          %s294 = ssub.s32 16, 16
          %295 = vsyncadd [#allocation13], %s294
          %s297 = sshll.u32 [#allocation14], 4
          %s298 = int_to_ptr.vmem [resolvable:$true] %s297
          %300 = dma.hbm_to_vmem [thread:$0]  %s6, 16, %s298, [#allocation13]
        $region36: #{us_bottleneck_forward.1} parent=11 // pred_fallthru
          _
      $region12: #{us_bottleneck_forward.1} parent=5 // pred_fallthru
        _
      %p301 = scmp.lt.s32.totalorder %s22, 2
      // Predicated region
      $region37: #{us_bottleneck_forward.1} parent=5 // pred_check
        %p302 = pneg %p301
      $region38: #{us_bottleneck_forward.1} parent=5 // pred_check_branch
        %304 = sbr.rel (%p302) target = $region40
      $region39: #{us_bottleneck_forward.1} parent=5 // pred_region
        // Predicated region
        $region41: #{us_bottleneck_forward.1} parent=39 // pred_check
          %p305 = pneg %p54
        $region42: #{us_bottleneck_forward.1} parent=39 // pred_check_branch
          %307 = sbr.rel (%p305) target = $region44
        $region43: #{us_bottleneck_forward.1} parent=39 // pred_region
          %s308 = sand.u32 %s44, 1
          %s309 = scalar_lea.sflag [#allocation4], %s308
          %s310 = sand.u32 %s44, 1
          %s311 = smul.addr %s310, 32
          %s312 = scalar_lea.vmem [#allocation3], %s311
          %s314 = ssub.s32 512, 512
          %315 = vsyncadd %s309, %s314
          %s316 = smul.addr %s29, 8
          %s317 = smul.addr %s316, 64
          %s318 = scalar_lea.hbm %s0, %s317
          %s319 = sshll.u32 %s312, 4
          %s320 = int_to_ptr.vmem [resolvable:$true] %s319
          %325 = dma.hbm_to_vmem [thread:$0]  %s318, 512, %s320, %s309, 64, 64, 4
        $region44: #{us_bottleneck_forward.1} parent=39 // pred_fallthru
          _
      $region40: #{us_bottleneck_forward.1} parent=5 // pred_fallthru
        _
      %p326 = scmp.le.s32.totalorder 1, %s22
      %p327 = scmp.lt.s32.totalorder %s22, 3
      %p328 = pnand %p326, %p327
      %p329 = pneg %p328
      // Predicated region
      $region45: #{us_bottleneck_forward.1} parent=5 // pred_check
        _
      $region46: #{us_bottleneck_forward.1} parent=5 // pred_check_branch
        %331 = sbr.rel (%p328) target = $region48
      $region47: #{us_bottleneck_forward.1} parent=5 // pred_region
        %s332 = ssub.s32 %s22, 1
        %s333 = sand.u32 %s47, 1
        %s334 = scalar_lea.sflag [#allocation4], %s333
        %s335 = sand.u32 %s47, 1
        %s336 = smul.addr %s335, 32
        %s337 = scalar_lea.vmem [#allocation3], %s336
        // Predicated region
        $region49: #{us_bottleneck_forward.1} parent=47 // pred_check
          %p338 = pneg %p60
        $region50: #{us_bottleneck_forward.1} parent=47 // pred_check_branch
          %340 = sbr.rel (%p338) target = $region52
        $region51: #{us_bottleneck_forward.1} parent=47 // pred_region
          %341 = dma.done %s334, 512
        $region52: #{us_bottleneck_forward.1} parent=47 // pred_fallthru
          _
        // Predicated region
        $region53: #{us_bottleneck_forward.1} parent=47 // pred_check
          %p342 = pneg %p81
        $region54: #{us_bottleneck_forward.1} parent=47 // pred_check_branch
          %344 = sbr.rel (%p342) target = $region56
        $region55: #{us_bottleneck_forward.1} parent=47 // pred_region
          %345 = dma.done [#allocation7], 1024
        $region56: #{us_bottleneck_forward.1} parent=47 // pred_fallthru
          _
        // Predicated region
        $region57: #{us_bottleneck_forward.1} parent=47 // pred_check
          %p346 = pneg %p102
        $region58: #{us_bottleneck_forward.1} parent=47 // pred_check_branch
          %348 = sbr.rel (%p346) target = $region60
        $region59: #{us_bottleneck_forward.1} parent=47 // pred_region
          %349 = dma.done [#allocation7], 16
        $region60: #{us_bottleneck_forward.1} parent=47 // pred_fallthru
          _
        // Predicated region
        $region61: #{us_bottleneck_forward.1} parent=47 // pred_check
          %p350 = pneg %p123
        $region62: #{us_bottleneck_forward.1} parent=47 // pred_check_branch
          %352 = sbr.rel (%p350) target = $region64
        $region63: #{us_bottleneck_forward.1} parent=47 // pred_region
          %353 = dma.done [#allocation10], 2304
        $region64: #{us_bottleneck_forward.1} parent=47 // pred_fallthru
          _
        // Predicated region
        $region65: #{us_bottleneck_forward.1} parent=47 // pred_check
          %p354 = pneg %p144
        $region66: #{us_bottleneck_forward.1} parent=47 // pred_check_branch
          %356 = sbr.rel (%p354) target = $region68
        $region67: #{us_bottleneck_forward.1} parent=47 // pred_region
          %357 = dma.done [#allocation10], 16
        $region68: #{us_bottleneck_forward.1} parent=47 // pred_fallthru
          _
        // Predicated region
        $region69: #{us_bottleneck_forward.1} parent=47 // pred_check
          %p358 = pneg %p165
        $region70: #{us_bottleneck_forward.1} parent=47 // pred_check_branch
          %360 = sbr.rel (%p358) target = $region72
        $region71: #{us_bottleneck_forward.1} parent=47 // pred_region
          %361 = dma.done [#allocation13], 256
        $region72: #{us_bottleneck_forward.1} parent=47 // pred_fallthru
          _
        // Predicated region
        $region73: #{us_bottleneck_forward.1} parent=47 // pred_check
          %p362 = pneg %p186
        $region74: #{us_bottleneck_forward.1} parent=47 // pred_check_branch
          %364 = sbr.rel (%p362) target = $region76
        $region75: #{us_bottleneck_forward.1} parent=47 // pred_region
          %365 = dma.done [#allocation13], 16
        $region76: #{us_bottleneck_forward.1} parent=47 // pred_fallthru
          _
        %s366 = sand.u32 %s47, 1
        %s367 = scalar_lea.sflag [#allocation4], %s366
        %s368 = sand.u32 %s47, 1
        %s369 = smul.addr %s368, 32
        %s370 = scalar_lea.vmem [#allocation3], %s369
        %p371 = pneg %p60
        %p372 = pneg %p57
        %p373 = pneg %p81
        %p374 = pneg %p78
        %p375 = pneg %p102
        %p376 = pneg %p99
        %p377 = pneg %p123
        %p378 = pneg %p120
        %p379 = pneg %p144
        %p380 = pneg %p141
        %p381 = pneg %p165
        %p382 = pneg %p162
        %p383 = pneg %p186
        %p384 = pneg %p183
        %p385 = pneg %p214
        %p386 = pneg %p211
        %s387 = sand.u32 %s201, 1
        %s388 = scalar_lea.sflag [#allocation5], %s387
        %s389 = sand.u32 %s201, 1
        %s390 = smul.addr %s389, 32
        %s391 = scalar_lea.vmem [#allocation15], %s390
        %s392 = smul.u32 8, %s32
        %v394 = vld [vmem:[%s337] sm:$0xf]
        %v395 = vld [vmem:[%s337 + $0x4] sm:$0xf]
        %v396 = vld [vmem:[%s337 + $0x8] sm:$0xf]
        %v397 = vld [vmem:[%s337 + $0xc] sm:$0xf]
        %v398 = vld [vmem:[%s337 + $0x10] sm:$0xf]
        %v399 = vld [vmem:[%s337 + $0x14] sm:$0xf]
        %v400 = vld [vmem:[%s337 + $0x18] sm:$0xf]
        %v401 = vld [vmem:[%s337 + $0x1c] sm:$0xf]
        %v402 = vld [vmem:[#allocation6] sm:$0xf]
        %v403 = vld [vmem:[#allocation6 + $0x4] sm:$0xf]
        %v404 = vld [vmem:[#allocation6 + $0x8] sm:$0xf]
        %v405 = vld [vmem:[#allocation6 + $0xc] sm:$0xf]
        %v406 = vld [vmem:[#allocation6 + $0x10] sm:$0xf]
        %v407 = vld [vmem:[#allocation6 + $0x14] sm:$0xf]
        %v408 = vld [vmem:[#allocation6 + $0x18] sm:$0xf]
        %v409 = vld [vmem:[#allocation6 + $0x1c] sm:$0xf]
        %v410 = vld [vmem:[#allocation6 + $0x20] sm:$0xf]
        %v411 = vld [vmem:[#allocation6 + $0x24] sm:$0xf]
        %v412 = vld [vmem:[#allocation6 + $0x28] sm:$0xf]
        %v413 = vld [vmem:[#allocation6 + $0x2c] sm:$0xf]
        %v414 = vld [vmem:[#allocation6 + $0x30] sm:$0xf]
        %v415 = vld [vmem:[#allocation6 + $0x34] sm:$0xf]
        %v416 = vld [vmem:[#allocation6 + $0x38] sm:$0xf]
        %v417 = vld [vmem:[#allocation6 + $0x3c] sm:$0xf]
        %v418 = vld [vmem:[#allocation8] sm:$0x1]
        %v420 = vlaneseq
        %v421 = vshrl.u32 %v420, 7
        %v422 = vsub.s32 0, %v421
        %v423 = vrot.slane %v418, %v422
        %v433 = vunpack.c.l.b16 %v394
        %v434 = vunpack.c.l.b16 %v395
        %v435 = vunpack.c.l.b16 %v396
        %v436 = vunpack.c.l.b16 %v397
        %v437 = vunpack.c.l.b16 %v398
        %v438 = vunpack.c.l.b16 %v399
        %v439 = vunpack.c.l.b16 %v400
        %v440 = vunpack.c.l.b16 %v401
        %v441 = vpack.c.b16 %v434, %v433
        %v442 = vpack.c.b16 %v436, %v435
        %v443 = vpack.c.b16 %v438, %v437
        %v444 = vpack.c.b16 %v440, %v439
        %v465 = vunpack.c.l.b16 %v402
        %v466 = vunpack.c.l.b16 %v403
        %v467 = vunpack.c.l.b16 %v404
        %v468 = vunpack.c.l.b16 %v405
        %v469 = vunpack.c.l.b16 %v406
        %v470 = vunpack.c.l.b16 %v407
        %v471 = vunpack.c.l.b16 %v408
        %v472 = vunpack.c.l.b16 %v409
        %v473 = vunpack.c.l.b16 %v410
        %v474 = vunpack.c.l.b16 %v411
        %v475 = vunpack.c.l.b16 %v412
        %v476 = vunpack.c.l.b16 %v413
        %v477 = vunpack.c.l.b16 %v414
        %v478 = vunpack.c.l.b16 %v415
        %v479 = vunpack.c.l.b16 %v416
        %v480 = vunpack.c.l.b16 %v417
        %v481 = vpack.c.b16 %v466, %v465
        %v482 = vpack.c.b16 %v468, %v467
        %v483 = vpack.c.b16 %v470, %v469
        %v484 = vpack.c.b16 %v472, %v471
        %v485 = vpack.c.b16 %v474, %v473
        %v486 = vpack.c.b16 %v476, %v475
        %v487 = vpack.c.b16 %v478, %v477
        %v488 = vpack.c.b16 %v480, %v479
        %497 = vmatprep.subr.bf16.mxu0 0
        %498 = vmatpush1.bf16.msra.mxu0 %v481
        %499 = vmatprep.subr.bf16.mxu0 0
        %500 = vmatpush1.bf16.msra.mxu0 %v482
        %501 = vmatprep.subr.bf16.mxu0 0
        %502 = vmatpush1.bf16.msra.mxu0 %v483
        %503 = vmatprep.subr.bf16.mxu0 0
        %504 = vmatpush1.bf16.msra.mxu0 %v484
        %505 = vmatprep.subr.bf16.mxu0 0
        %506 = vmatpush1.bf16.msra.mxu0 %v485
        %507 = vmatprep.subr.bf16.mxu0 0
        %508 = vmatpush1.bf16.msra.mxu0 %v486
        %509 = vmatprep.subr.bf16.mxu0 0
        %510 = vmatpush1.bf16.msra.mxu0 %v487
        %511 = vmatprep.subr.bf16.mxu0 0
        %512 = vmatpush1.bf16.msra.mxu0 %v488
        %513 = vmatprep.subr.bf16.mxu0 0
        %514 = vmatpush1.bf16.msra.mxu0 0
        %515 = vmatprep.subr.bf16.mxu0 0
        %516 = vmatpush1.bf16.msra.mxu0 0
        %517 = vmatprep.subr.bf16.mxu0 0
        %518 = vmatpush1.bf16.msra.mxu0 0
        %519 = vmatprep.subr.bf16.mxu0 0
        %520 = vmatpush1.bf16.msra.mxu0 0
        %521 = vmatprep.subr.bf16.mxu0 0
        %522 = vmatpush1.bf16.msra.mxu0 0
        %523 = vmatprep.subr.bf16.mxu0 0
        %524 = vmatpush1.bf16.msra.mxu0 0
        %525 = vmatprep.subr.bf16.mxu0 0
        %526 = vmatpush1.bf16.msra.mxu0 0
        %527 = vmatprep.subr.bf16.mxu0 0
        %528 = vmatpush1.bf16.msra.mxu0 0
        %529 = vmatprep.mubr.bf16.mxu0 0
        %530 = vmatmul.mubr.bf16.gmra.mrb[0].mxu0 %v441
        %v531 = vpop.f32.mrb[0].mxu0
        %v532 = vadd.f32 %v423, %v531
        %v533 = vpop.f32.mrb[0].mxu0
        %v534 = vpop.f32.mrb[0].mxu0
        %v535 = vadd.f32 %v423, %v534
        %v536 = vpop.f32.mrb[0].mxu0
        %537 = vmatprep.mubr.bf16.mxu0 0
        %538 = vmatmul.mubr.bf16.gmra.mrb[0].mxu0 %v442
        %v539 = vpop.f32.mrb[0].mxu0
        %v540 = vadd.f32 %v423, %v539
        %v541 = vpop.f32.mrb[0].mxu0
        %v542 = vpop.f32.mrb[0].mxu0
        %v543 = vadd.f32 %v423, %v542
        %v544 = vpop.f32.mrb[0].mxu0
        %545 = vmatprep.mubr.bf16.mxu0 0
        %546 = vmatmul.mubr.bf16.gmra.mrb[0].mxu0 %v443
        %v547 = vpop.f32.mrb[0].mxu0
        %v548 = vadd.f32 %v423, %v547
        %v549 = vpop.f32.mrb[0].mxu0
        %v550 = vpop.f32.mrb[0].mxu0
        %v551 = vadd.f32 %v423, %v550
        %v552 = vpop.f32.mrb[0].mxu0
        %553 = vmatprep.mubr.bf16.mxu0 0
        %554 = vmatmul.mubr.bf16.gmra.mrb[0].mxu0 %v444
        %v555 = vpop.f32.mrb[0].mxu0
        %v556 = vadd.f32 %v423, %v555
        %v557 = vpop.f32.mrb[0].mxu0
        %v558 = vpop.f32.mrb[0].mxu0
        %v559 = vadd.f32 %v423, %v558
        %v560 = vpop.f32.mrb[0].mxu0
        %561 = vdwg.mxu0
        %v562 = vmax.f32 %v532, 0.0
        %v563 = vmax.f32 %v535, 0.0
        %v564 = vmax.f32 %v540, 0.0
        %v565 = vmax.f32 %v543, 0.0
        %v566 = vmax.f32 %v548, 0.0
        %v567 = vmax.f32 %v551, 0.0
        %v568 = vmax.f32 %v556, 0.0
        %v569 = vmax.f32 %v559, 0.0
        %v570 = vpack.c.bf16 %v563, %v562
        %v571 = vpack.c.bf16 %v565, %v564
        %v572 = vpack.c.bf16 %v567, %v566
        %v573 = vpack.c.bf16 %v569, %v568
        %vm574 = vcmask 261120
        %575 = vst.msk [vmem:[#allocation2] sm:$0xff] %vm574, 0
        %576 = vst.msk [vmem:[#allocation2 + $0x28] sm:$0xff] %vm574, 0
        %577 = vst.msk [vmem:[#allocation2 + $0x8] sm:$0xff] %vm574, %v570
        %578 = vst.msk [vmem:[#allocation2 + $0x10] sm:$0xff] %vm574, %v571
        %579 = vst.msk [vmem:[#allocation2 + $0x18] sm:$0xff] %vm574, %v572
        %580 = vst.msk [vmem:[#allocation2 + $0x20] sm:$0xff] %vm574, %v573
        %v581 = vlaneseq
        %v582 = vshrl.u32 %v581, 7
        %v583 = vadd.s32 %v582, 8
        %v584 = vadd.s32 %v582, 16
        %v585 = vadd.s32 %v582, 24
        %v586 = vadd.s32 %v582, 32
        %v587 = vadd.s32 %v582, 40
        %v588 = vadd.s32 %v582, 48
        %v589 = vadd.s32 %v582, 56
        %vm590 = vcmp.lt.s32.totalorder %v582, 0
        %v591 = vsub.s32 0, %v582
        %v592 = vsel %vm590, %v591, %v582
        %v593 = vshrl.u32 %v592, 3
        %v594 = vand.u32 %v592, 7
        %v595 = vsub.s32 0, %v594
        %v596 = vsel %vm590, %v595, %v594
        %vm597 = vcmp.lt.s32.totalorder %v583, 0
        %v598 = vsub.s32 0, %v583
        %v599 = vsel %vm597, %v598, %v583
        %v600 = vshrl.u32 %v599, 3
        %v601 = vand.u32 %v599, 7
        %v602 = vsub.s32 0, %v601
        %v603 = vsel %vm597, %v602, %v601
        %vm604 = vcmp.lt.s32.totalorder %v584, 0
        %v605 = vsub.s32 0, %v584
        %v606 = vsel %vm604, %v605, %v584
        %v607 = vshrl.u32 %v606, 3
        %v608 = vand.u32 %v606, 7
        %v609 = vsub.s32 0, %v608
        %v610 = vsel %vm604, %v609, %v608
        %vm611 = vcmp.lt.s32.totalorder %v585, 0
        %v612 = vsub.s32 0, %v585
        %v613 = vsel %vm611, %v612, %v585
        %v614 = vshrl.u32 %v613, 3
        %v615 = vand.u32 %v613, 7
        %v616 = vsub.s32 0, %v615
        %v617 = vsel %vm611, %v616, %v615
        %vm618 = vcmp.lt.s32.totalorder %v586, 0
        %v619 = vsub.s32 0, %v586
        %v620 = vsel %vm618, %v619, %v586
        %v621 = vshrl.u32 %v620, 3
        %v622 = vand.u32 %v620, 7
        %v623 = vsub.s32 0, %v622
        %v624 = vsel %vm618, %v623, %v622
        %vm625 = vcmp.lt.s32.totalorder %v587, 0
        %v626 = vsub.s32 0, %v587
        %v627 = vsel %vm625, %v626, %v587
        %v628 = vshrl.u32 %v627, 3
        %v629 = vand.u32 %v627, 7
        %v630 = vsub.s32 0, %v629
        %v631 = vsel %vm625, %v630, %v629
        %vm632 = vcmp.lt.s32.totalorder %v588, 0
        %v633 = vsub.s32 0, %v588
        %v634 = vsel %vm632, %v633, %v588
        %v635 = vshrl.u32 %v634, 3
        %v636 = vand.u32 %v634, 7
        %v637 = vsub.s32 0, %v636
        %v638 = vsel %vm632, %v637, %v636
        %vm639 = vcmp.lt.s32.totalorder %v589, 0
        %v640 = vsub.s32 0, %v589
        %v641 = vsel %vm639, %v640, %v589
        %v642 = vshrl.u32 %v641, 3
        %v643 = vand.u32 %v641, 7
        %v644 = vsub.s32 0, %v643
        %v645 = vsel %vm639, %v644, %v643
        %vm646 = vcmp.ne.s32.totalorder %v596, 0
        %vm647 = vcmp.ne.s32.totalorder %v603, 0
        %vm648 = vcmp.ne.s32.totalorder %v610, 0
        %vm649 = vcmp.ne.s32.totalorder %v617, 0
        %vm650 = vcmp.ne.s32.totalorder %v624, 0
        %vm651 = vcmp.ne.s32.totalorder %v631, 0
        %vm652 = vcmp.ne.s32.totalorder %v638, 0
        %vm653 = vcmp.ne.s32.totalorder %v645, 0
        %vm654 = vcmp.lt.s32.totalorder %v596, 0
        %vm655 = vcmp.lt.s32.totalorder %v603, 0
        %vm656 = vcmp.lt.s32.totalorder %v610, 0
        %vm657 = vcmp.lt.s32.totalorder %v617, 0
        %vm658 = vcmp.lt.s32.totalorder %v624, 0
        %vm659 = vcmp.lt.s32.totalorder %v631, 0
        %vm660 = vcmp.lt.s32.totalorder %v638, 0
        %vm661 = vcmp.lt.s32.totalorder %v645, 0
        %vm662 = vmand %vm654, %vm646
        %vm663 = vmand %vm655, %vm647
        %vm664 = vmand %vm656, %vm648
        %vm665 = vmand %vm657, %vm649
        %vm666 = vmand %vm658, %vm650
        %vm667 = vmand %vm659, %vm651
        %vm668 = vmand %vm660, %vm652
        %vm669 = vmand %vm661, %vm653
        %v670 = vadd.s32 %v596, 8
        %v671 = vadd.s32 %v603, 8
        %v672 = vadd.s32 %v610, 8
        %v673 = vadd.s32 %v617, 8
        %v674 = vadd.s32 %v624, 8
        %v675 = vadd.s32 %v631, 8
        %v676 = vadd.s32 %v638, 8
        %v677 = vadd.s32 %v645, 8
        %v678 = vsel %vm662, %v670, %v596
        %v679 = vsel %vm663, %v671, %v603
        %v680 = vsel %vm664, %v672, %v610
        %v681 = vsel %vm665, %v673, %v617
        %v682 = vsel %vm666, %v674, %v624
        %v683 = vsel %vm667, %v675, %v631
        %v684 = vsel %vm668, %v676, %v638
        %v685 = vsel %vm669, %v677, %v645
        %vm686 = vcmp.ge.s32.totalorder %v678, 1
        %vm687 = vcmp.ge.s32.totalorder %v679, 1
        %vm688 = vcmp.ge.s32.totalorder %v680, 1
        %vm689 = vcmp.ge.s32.totalorder %v681, 1
        %vm690 = vcmp.ge.s32.totalorder %v682, 1
        %vm691 = vcmp.ge.s32.totalorder %v683, 1
        %vm692 = vcmp.ge.s32.totalorder %v684, 1
        %vm693 = vcmp.ge.s32.totalorder %v685, 1
        %vm694 = vcmp.le.s32.totalorder %v678, 6
        %vm695 = vcmp.le.s32.totalorder %v679, 6
        %vm696 = vcmp.le.s32.totalorder %v680, 6
        %vm697 = vcmp.le.s32.totalorder %v681, 6
        %vm698 = vcmp.le.s32.totalorder %v682, 6
        %vm699 = vcmp.le.s32.totalorder %v683, 6
        %vm700 = vcmp.le.s32.totalorder %v684, 6
        %vm701 = vcmp.le.s32.totalorder %v685, 6
        %v702 = vld [vmem:[#allocation2] sm:$0xf8]
        %v703 = vld [vmem:[#allocation2 + $0x8] sm:$0xff]
        %v704 = vld [vmem:[#allocation2 + $0x10] sm:$0xff]
        %v705 = vld [vmem:[#allocation2 + $0x18] sm:$0xff]
        %v706 = vld [vmem:[#allocation2 + $0x20] sm:$0xf]
        %v707 = vld [vmem:[#allocation9] sm:$0xf]
        %v708 = vld [vmem:[#allocation9 + $0x4] sm:$0xf]
        %v709 = vld [vmem:[#allocation9 + $0x8] sm:$0xf]
        %v710 = vld [vmem:[#allocation9 + $0xc] sm:$0xf]
        %v711 = vld [vmem:[#allocation2] sm:$0x80]
        %v712 = vld [vmem:[#allocation2 + $0x20] sm:$0xff]
        %s713 = scalar_lea.vmem [#allocation9], 48
        %v714 = vld [vmem:[%s713] sm:$0xf]
        %v715 = vld [vmem:[%s713 + $0x4] sm:$0xf]
        %v716 = vld [vmem:[%s713 + $0x8] sm:$0xf]
        %v717 = vld [vmem:[%s713 + $0xc] sm:$0xf]
        %vm718 = vsmask.f32 256
        %v720 = vshrl.u32 %v711, 16
        %v722 = vrot.slane %v720, 7
        %v724 = vshrl.u32 %v703, 16
        %v726 = vrot.slane %v724, 7
        %v727 = vshll.u32 %v703, 16
        %v729 = vor.u32 %v726, %v727
        %v730 = vsel %vm718, %v722, %v729
        %v732 = vshrl.u32 %v704, 16
        %v734 = vrot.slane %v732, 7
        %v735 = vshll.u32 %v704, 16
        %v737 = vor.u32 %v734, %v735
        %v738 = vsel %vm718, %v726, %v737
        %v740 = vshrl.u32 %v705, 16
        %v742 = vrot.slane %v740, 7
        %v743 = vshll.u32 %v705, 16
        %v745 = vor.u32 %v742, %v743
        %v746 = vsel %vm718, %v734, %v745
        %v748 = vshrl.u32 %v712, 16
        %v750 = vrot.slane %v748, 7
        %v751 = vshll.u32 %v712, 16
        %v753 = vor.u32 %v750, %v751
        %v754 = vsel %vm718, %v742, %v753
        %v759 = vunpack.c.l.b16 %v714
        %v760 = vunpack.c.l.b16 %v715
        %v761 = vunpack.c.l.b16 %v716
        %v762 = vunpack.c.l.b16 %v717
        %v763 = vpack.c.b16 %v760, %v759
        %v764 = vpack.c.b16 %v762, %v761
        %v768 = vsel %vm574, %v730, 0
        %v771 = vsel %vm574, %v738, 0
        %v774 = vsel %vm574, %v746, 0
        %v777 = vsel %vm574, %v754, 0
        %779 = vmatprep.subr.bf16.mxu0 0
        %780 = vmatpush1.bf16.msra.mxu0 %v763
        %781 = vmatprep.subr.bf16.mxu0 0
        %782 = vmatpush1.bf16.msra.mxu0 %v764
        %783 = vmatprep.subr.bf16.mxu0 0
        %784 = vmatpush1.bf16.msra.mxu0 0
        %785 = vmatprep.subr.bf16.mxu0 0
        %786 = vmatpush1.bf16.msra.mxu0 0
        %787 = vmatprep.subr.bf16.mxu0 0
        %788 = vmatpush1.bf16.msra.mxu0 0
        %789 = vmatprep.subr.bf16.mxu0 0
        %790 = vmatpush1.bf16.msra.mxu0 0
        %791 = vmatprep.subr.bf16.mxu0 0
        %792 = vmatpush1.bf16.msra.mxu0 0
        %793 = vmatprep.subr.bf16.mxu0 0
        %794 = vmatpush1.bf16.msra.mxu0 0
        %795 = vmatprep.subr.bf16.mxu0 0
        %796 = vmatpush1.bf16.msra.mxu0 0
        %797 = vmatprep.subr.bf16.mxu0 0
        %798 = vmatpush1.bf16.msra.mxu0 0
        %799 = vmatprep.subr.bf16.mxu0 0
        %800 = vmatpush1.bf16.msra.mxu0 0
        %801 = vmatprep.subr.bf16.mxu0 0
        %802 = vmatpush1.bf16.msra.mxu0 0
        %803 = vmatprep.subr.bf16.mxu0 0
        %804 = vmatpush1.bf16.msra.mxu0 0
        %805 = vmatprep.subr.bf16.mxu0 0
        %806 = vmatpush1.bf16.msra.mxu0 0
        %807 = vmatprep.subr.bf16.mxu0 0
        %808 = vmatpush1.bf16.msra.mxu0 0
        %809 = vmatprep.subr.bf16.mxu0 0
        %810 = vmatpush1.bf16.msra.mxu0 0
        %811 = vmatprep.mubr.bf16.mxu0 0
        %812 = vmatmul.mubr.bf16.gmra.mrb[0].mxu0 %v768
        %v813 = vpop.f32.mrb[0].mxu0
        %v814 = vadd.f32 0.0, %v813
        %v815 = vpop.f32.mrb[0].mxu0
        %v816 = vpop.f32.mrb[0].mxu0
        %v817 = vadd.f32 0.0, %v816
        %v818 = vpop.f32.mrb[0].mxu0
        %819 = vmatprep.mubr.bf16.mxu0 0
        %820 = vmatmul.mubr.bf16.gmra.mrb[0].mxu0 %v771
        %v821 = vpop.f32.mrb[0].mxu0
        %v822 = vadd.f32 0.0, %v821
        %v823 = vpop.f32.mrb[0].mxu0
        %v824 = vpop.f32.mrb[0].mxu0
        %v825 = vadd.f32 0.0, %v824
        %v826 = vpop.f32.mrb[0].mxu0
        %827 = vmatprep.mubr.bf16.mxu0 0
        %828 = vmatmul.mubr.bf16.gmra.mrb[0].mxu0 %v774
        %v829 = vpop.f32.mrb[0].mxu0
        %v830 = vadd.f32 0.0, %v829
        %v831 = vpop.f32.mrb[0].mxu0
        %v832 = vpop.f32.mrb[0].mxu0
        %v833 = vadd.f32 0.0, %v832
        %v834 = vpop.f32.mrb[0].mxu0
        %835 = vmatprep.mubr.bf16.mxu0 0
        %836 = vmatmul.mubr.bf16.gmra.mrb[0].mxu0 %v777
        %v837 = vpop.f32.mrb[0].mxu0
        %v838 = vadd.f32 0.0, %v837
        %v839 = vpop.f32.mrb[0].mxu0
        %v840 = vpop.f32.mrb[0].mxu0
        %v841 = vadd.f32 0.0, %v840
        %v842 = vpop.f32.mrb[0].mxu0
        %843 = vdwg.mxu0
        %vm844 = vsmask.f32 4352
        %v846 = vshrl.u32 %v702, 16
        %v848 = vrot.slane %v846, 3
        %v849 = vshll.u32 %v702, 16
        %v851 = vrot.slane %v849, 4
        %v852 = vor.u32 %v848, %v851
        %v853 = vrot.slane %v724, 3
        %v854 = vrot.slane %v727, 4
        %v855 = vor.u32 %v853, %v854
        %v856 = vsel %vm844, %v852, %v855
        %v857 = vrot.slane %v732, 3
        %v858 = vrot.slane %v735, 4
        %v859 = vor.u32 %v857, %v858
        %v860 = vsel %vm844, %v855, %v859
        %v861 = vrot.slane %v740, 3
        %v862 = vrot.slane %v743, 4
        %v863 = vor.u32 %v861, %v862
        %v864 = vsel %vm844, %v859, %v863
        %v866 = vshrl.u32 %v706, 16
        %v868 = vrot.slane %v866, 3
        %v869 = vshll.u32 %v706, 16
        %v871 = vrot.slane %v869, 4
        %v872 = vor.u32 %v868, %v871
        %v873 = vsel %vm844, %v863, %v872
        %v878 = vunpack.c.l.b16 %v707
        %v879 = vunpack.c.l.b16 %v708
        %v880 = vunpack.c.l.b16 %v709
        %v881 = vunpack.c.l.b16 %v710
        %v882 = vpack.c.b16 %v879, %v878
        %v883 = vpack.c.b16 %v881, %v880
        %v887 = vsel %vm574, %v856, 0
        %v890 = vsel %vm574, %v860, 0
        %v893 = vsel %vm574, %v864, 0
        %v896 = vsel %vm574, %v873, 0
        %898 = vmatprep.subr.bf16.mxu0 0
        %899 = vmatpush1.bf16.msra.mxu0 %v882
        %900 = vmatprep.subr.bf16.mxu0 0
        %901 = vmatpush1.bf16.msra.mxu0 %v883
        %902 = vmatprep.subr.bf16.mxu0 0
        %903 = vmatpush1.bf16.msra.mxu0 0
        %904 = vmatprep.subr.bf16.mxu0 0
        %905 = vmatpush1.bf16.msra.mxu0 0
        %906 = vmatprep.subr.bf16.mxu0 0
        %907 = vmatpush1.bf16.msra.mxu0 0
        %908 = vmatprep.subr.bf16.mxu0 0
        %909 = vmatpush1.bf16.msra.mxu0 0
        %910 = vmatprep.subr.bf16.mxu0 0
        %911 = vmatpush1.bf16.msra.mxu0 0
        %912 = vmatprep.subr.bf16.mxu0 0
        %913 = vmatpush1.bf16.msra.mxu0 0
        %914 = vmatprep.subr.bf16.mxu0 0
        %915 = vmatpush1.bf16.msra.mxu0 0
        %916 = vmatprep.subr.bf16.mxu0 0
        %917 = vmatpush1.bf16.msra.mxu0 0
        %918 = vmatprep.subr.bf16.mxu0 0
        %919 = vmatpush1.bf16.msra.mxu0 0
        %920 = vmatprep.subr.bf16.mxu0 0
        %921 = vmatpush1.bf16.msra.mxu0 0
        %922 = vmatprep.subr.bf16.mxu0 0
        %923 = vmatpush1.bf16.msra.mxu0 0
        %924 = vmatprep.subr.bf16.mxu0 0
        %925 = vmatpush1.bf16.msra.mxu0 0
        %926 = vmatprep.subr.bf16.mxu0 0
        %927 = vmatpush1.bf16.msra.mxu0 0
        %928 = vmatprep.subr.bf16.mxu0 0
        %929 = vmatpush1.bf16.msra.mxu0 0
        %930 = vmatprep.mubr.bf16.mxu0 0
        %931 = vmatmul.mubr.bf16.gmra.mrb[0].mxu0 %v887
        %v932 = vpop.f32.mrb[0].mxu0
        %v933 = vadd.f32 %v814, %v932
        %v934 = vpop.f32.mrb[0].mxu0
        %v935 = vpop.f32.mrb[0].mxu0
        %v936 = vadd.f32 %v817, %v935
        %v937 = vpop.f32.mrb[0].mxu0
        %938 = vmatprep.mubr.bf16.mxu0 0
        %939 = vmatmul.mubr.bf16.gmra.mrb[0].mxu0 %v890
        %v940 = vpop.f32.mrb[0].mxu0
        %v941 = vadd.f32 %v822, %v940
        %v942 = vpop.f32.mrb[0].mxu0
        %v943 = vpop.f32.mrb[0].mxu0
        %v944 = vadd.f32 %v825, %v943
        %v945 = vpop.f32.mrb[0].mxu0
        %946 = vmatprep.mubr.bf16.mxu0 0
        %947 = vmatmul.mubr.bf16.gmra.mrb[0].mxu0 %v893
        %v948 = vpop.f32.mrb[0].mxu0
        %v949 = vadd.f32 %v830, %v948
        %v950 = vpop.f32.mrb[0].mxu0
        %v951 = vpop.f32.mrb[0].mxu0
        %v952 = vadd.f32 %v833, %v951
        %v953 = vpop.f32.mrb[0].mxu0
        %954 = vmatprep.mubr.bf16.mxu0 0
        %955 = vmatmul.mubr.bf16.gmra.mrb[0].mxu0 %v896
        %v956 = vpop.f32.mrb[0].mxu0
        %v957 = vadd.f32 %v838, %v956
        %v958 = vpop.f32.mrb[0].mxu0
        %v959 = vpop.f32.mrb[0].mxu0
        %v960 = vadd.f32 %v841, %v959
        %v961 = vpop.f32.mrb[0].mxu0
        %962 = vdwg.mxu0
        %v963 = vld [vmem:[#allocation2 + $0x8] sm:$0xf8]
        %v964 = vld [vmem:[#allocation2 + $0x10] sm:$0xff]
        %v965 = vld [vmem:[#allocation2 + $0x18] sm:$0xff]
        %v966 = vld [vmem:[#allocation2 + $0x20] sm:$0xff]
        %v967 = vld [vmem:[#allocation2 + $0x28] sm:$0xf]
        %s968 = scalar_lea.vmem [#allocation9], 96
        %v969 = vld [vmem:[%s968] sm:$0xf]
        %v970 = vld [vmem:[%s968 + $0x4] sm:$0xf]
        %v971 = vld [vmem:[%s968 + $0x8] sm:$0xf]
        %v972 = vld [vmem:[%s968 + $0xc] sm:$0xf]
        %v974 = vshrl.u32 %v963, 16
        %v976 = vrot.slane %v974, 3
        %v977 = vshll.u32 %v963, 16
        %v979 = vrot.slane %v977, 4
        %v980 = vor.u32 %v976, %v979
        %v982 = vshrl.u32 %v964, 16
        %v984 = vrot.slane %v982, 3
        %v985 = vshll.u32 %v964, 16
        %v987 = vrot.slane %v985, 4
        %v988 = vor.u32 %v984, %v987
        %v989 = vsel %vm844, %v980, %v988
        %v991 = vshrl.u32 %v965, 16
        %v993 = vrot.slane %v991, 3
        %v994 = vshll.u32 %v965, 16
        %v996 = vrot.slane %v994, 4
        %v997 = vor.u32 %v993, %v996
        %v998 = vsel %vm844, %v988, %v997
        %v1000 = vshrl.u32 %v966, 16
        %v1002 = vrot.slane %v1000, 3
        %v1003 = vshll.u32 %v966, 16
        %v1005 = vrot.slane %v1003, 4
        %v1006 = vor.u32 %v1002, %v1005
        %v1007 = vsel %vm844, %v997, %v1006
        %v1009 = vshrl.u32 %v967, 16
        %v1011 = vrot.slane %v1009, 3
        %v1012 = vshll.u32 %v967, 16
        %v1014 = vrot.slane %v1012, 4
        %v1015 = vor.u32 %v1011, %v1014
        %v1016 = vsel %vm844, %v1006, %v1015
        %v1021 = vunpack.c.l.b16 %v969
        %v1022 = vunpack.c.l.b16 %v970
        %v1023 = vunpack.c.l.b16 %v971
        %v1024 = vunpack.c.l.b16 %v972
        %v1025 = vpack.c.b16 %v1022, %v1021
        %v1026 = vpack.c.b16 %v1024, %v1023
        %v1030 = vsel %vm574, %v989, 0
        %v1033 = vsel %vm574, %v998, 0
        %v1036 = vsel %vm574, %v1007, 0
        %v1039 = vsel %vm574, %v1016, 0
        %1041 = vmatprep.subr.bf16.mxu0 0
        %1042 = vmatpush1.bf16.msra.mxu0 %v1025
        %1043 = vmatprep.subr.bf16.mxu0 0
        %1044 = vmatpush1.bf16.msra.mxu0 %v1026
        %1045 = vmatprep.subr.bf16.mxu0 0
        %1046 = vmatpush1.bf16.msra.mxu0 0
        %1047 = vmatprep.subr.bf16.mxu0 0
        %1048 = vmatpush1.bf16.msra.mxu0 0
        %1049 = vmatprep.subr.bf16.mxu0 0
        %1050 = vmatpush1.bf16.msra.mxu0 0
        %1051 = vmatprep.subr.bf16.mxu0 0
        %1052 = vmatpush1.bf16.msra.mxu0 0
        %1053 = vmatprep.subr.bf16.mxu0 0
        %1054 = vmatpush1.bf16.msra.mxu0 0
        %1055 = vmatprep.subr.bf16.mxu0 0
        %1056 = vmatpush1.bf16.msra.mxu0 0
        %1057 = vmatprep.subr.bf16.mxu0 0
        %1058 = vmatpush1.bf16.msra.mxu0 0
        %1059 = vmatprep.subr.bf16.mxu0 0
        %1060 = vmatpush1.bf16.msra.mxu0 0
        %1061 = vmatprep.subr.bf16.mxu0 0
        %1062 = vmatpush1.bf16.msra.mxu0 0
        %1063 = vmatprep.subr.bf16.mxu0 0
        %1064 = vmatpush1.bf16.msra.mxu0 0
        %1065 = vmatprep.subr.bf16.mxu0 0
        %1066 = vmatpush1.bf16.msra.mxu0 0
        %1067 = vmatprep.subr.bf16.mxu0 0
        %1068 = vmatpush1.bf16.msra.mxu0 0
        %1069 = vmatprep.subr.bf16.mxu0 0
        %1070 = vmatpush1.bf16.msra.mxu0 0
        %1071 = vmatprep.subr.bf16.mxu0 0
        %1072 = vmatpush1.bf16.msra.mxu0 0
        %1073 = vmatprep.mubr.bf16.mxu0 0
        %1074 = vmatmul.mubr.bf16.gmra.mrb[0].mxu0 %v1030
        %v1075 = vpop.f32.mrb[0].mxu0
        %v1076 = vadd.f32 0.0, %v1075
        %v1077 = vpop.f32.mrb[0].mxu0
        %v1078 = vpop.f32.mrb[0].mxu0
        %v1079 = vadd.f32 0.0, %v1078
        %v1080 = vpop.f32.mrb[0].mxu0
        %1081 = vmatprep.mubr.bf16.mxu0 0
        %1082 = vmatmul.mubr.bf16.gmra.mrb[0].mxu0 %v1033
        %v1083 = vpop.f32.mrb[0].mxu0
        %v1084 = vadd.f32 0.0, %v1083
        %v1085 = vpop.f32.mrb[0].mxu0
        %v1086 = vpop.f32.mrb[0].mxu0
        %v1087 = vadd.f32 0.0, %v1086
        %v1088 = vpop.f32.mrb[0].mxu0
        %1089 = vmatprep.mubr.bf16.mxu0 0
        %1090 = vmatmul.mubr.bf16.gmra.mrb[0].mxu0 %v1036
        %v1091 = vpop.f32.mrb[0].mxu0
        %v1092 = vadd.f32 0.0, %v1091
        %v1093 = vpop.f32.mrb[0].mxu0
        %v1094 = vpop.f32.mrb[0].mxu0
        %v1095 = vadd.f32 0.0, %v1094
        %v1096 = vpop.f32.mrb[0].mxu0
        %1097 = vmatprep.mubr.bf16.mxu0 0
        %1098 = vmatmul.mubr.bf16.gmra.mrb[0].mxu0 %v1039
        %v1099 = vpop.f32.mrb[0].mxu0
        %v1100 = vadd.f32 0.0, %v1099
        %v1101 = vpop.f32.mrb[0].mxu0
        %v1102 = vpop.f32.mrb[0].mxu0
        %v1103 = vadd.f32 0.0, %v1102
        %v1104 = vpop.f32.mrb[0].mxu0
        %1105 = vdwg.mxu0
        %v1106 = vadd.f32 %v933, %v1076
        %v1107 = vadd.f32 %v936, %v1079
        %v1108 = vadd.f32 %v941, %v1084
        %v1109 = vadd.f32 %v944, %v1087
        %v1110 = vadd.f32 %v949, %v1092
        %v1111 = vadd.f32 %v952, %v1095
        %v1112 = vadd.f32 %v957, %v1100
        %v1113 = vadd.f32 %v960, %v1103
        %v1114 = vsel %vm686, 1, 0
        %v1115 = vsel %vm687, 1, 0
        %v1116 = vsel %vm688, 1, 0
        %v1117 = vsel %vm689, 1, 0
        %v1118 = vsel %vm690, 1, 0
        %v1119 = vsel %vm691, 1, 0
        %v1120 = vsel %vm692, 1, 0
        %v1121 = vsel %vm693, 1, 0
        %vm1122 = vcmp.eq.s32.totalorder %v1114, 1
        %vm1123 = vcmp.eq.s32.totalorder %v1115, 1
        %vm1124 = vcmp.eq.s32.totalorder %v1116, 1
        %vm1125 = vcmp.eq.s32.totalorder %v1117, 1
        %vm1126 = vcmp.eq.s32.totalorder %v1118, 1
        %vm1127 = vcmp.eq.s32.totalorder %v1119, 1
        %vm1128 = vcmp.eq.s32.totalorder %v1120, 1
        %vm1129 = vcmp.eq.s32.totalorder %v1121, 1
        %v1130 = vsel %vm1122, %v1106, 0.0
        %v1131 = vsel %vm1123, %v1107, 0.0
        %v1132 = vsel %vm1124, %v1108, 0.0
        %v1133 = vsel %vm1125, %v1109, 0.0
        %v1134 = vsel %vm1126, %v1110, 0.0
        %v1135 = vsel %vm1127, %v1111, 0.0
        %v1136 = vsel %vm1128, %v1112, 0.0
        %v1137 = vsel %vm1129, %v1113, 0.0
        %v1138 = vadd.f32 %v1130, 0.0
        %v1139 = vadd.f32 %v1131, 0.0
        %v1140 = vadd.f32 %v1132, 0.0
        %v1141 = vadd.f32 %v1133, 0.0
        %v1142 = vadd.f32 %v1134, 0.0
        %v1143 = vadd.f32 %v1135, 0.0
        %v1144 = vadd.f32 %v1136, 0.0
        %v1145 = vadd.f32 %v1137, 0.0
        %v1146 = vld [vmem:[#allocation2] sm:$0xf0]
        %s1147 = scalar_lea.vmem [#allocation9], 16
        %v1148 = vld [vmem:[%s1147] sm:$0xf]
        %v1149 = vld [vmem:[%s1147 + $0x4] sm:$0xf]
        %v1150 = vld [vmem:[%s1147 + $0x8] sm:$0xf]
        %v1151 = vld [vmem:[%s1147 + $0xc] sm:$0xf]
        %s1152 = scalar_lea.vmem [#allocation9], 64
        %v1153 = vld [vmem:[%s1152] sm:$0xf]
        %v1154 = vld [vmem:[%s1152 + $0x4] sm:$0xf]
        %v1155 = vld [vmem:[%s1152 + $0x8] sm:$0xf]
        %v1156 = vld [vmem:[%s1152 + $0xc] sm:$0xf]
        %v1161 = vunpack.c.l.b16 %v1153
        %v1162 = vunpack.c.l.b16 %v1154
        %v1163 = vunpack.c.l.b16 %v1155
        %v1164 = vunpack.c.l.b16 %v1156
        %v1165 = vpack.c.b16 %v1162, %v1161
        %v1166 = vpack.c.b16 %v1164, %v1163
        %v1169 = vsel %vm574, %v703, 0
        %v1171 = vsel %vm574, %v704, 0
        %v1173 = vsel %vm574, %v705, 0
        %v1175 = vsel %vm574, %v712, 0
        %1177 = vmatprep.subr.bf16.mxu0 0
        %1178 = vmatpush1.bf16.msra.mxu0 %v1165
        %1179 = vmatprep.subr.bf16.mxu0 0
        %1180 = vmatpush1.bf16.msra.mxu0 %v1166
        %1181 = vmatprep.subr.bf16.mxu0 0
        %1182 = vmatpush1.bf16.msra.mxu0 0
        %1183 = vmatprep.subr.bf16.mxu0 0
        %1184 = vmatpush1.bf16.msra.mxu0 0
        %1185 = vmatprep.subr.bf16.mxu0 0
        %1186 = vmatpush1.bf16.msra.mxu0 0
        %1187 = vmatprep.subr.bf16.mxu0 0
        %1188 = vmatpush1.bf16.msra.mxu0 0
        %1189 = vmatprep.subr.bf16.mxu0 0
        %1190 = vmatpush1.bf16.msra.mxu0 0
        %1191 = vmatprep.subr.bf16.mxu0 0
        %1192 = vmatpush1.bf16.msra.mxu0 0
        %1193 = vmatprep.subr.bf16.mxu0 0
        %1194 = vmatpush1.bf16.msra.mxu0 0
        %1195 = vmatprep.subr.bf16.mxu0 0
        %1196 = vmatpush1.bf16.msra.mxu0 0
        %1197 = vmatprep.subr.bf16.mxu0 0
        %1198 = vmatpush1.bf16.msra.mxu0 0
        %1199 = vmatprep.subr.bf16.mxu0 0
        %1200 = vmatpush1.bf16.msra.mxu0 0
        %1201 = vmatprep.subr.bf16.mxu0 0
        %1202 = vmatpush1.bf16.msra.mxu0 0
        %1203 = vmatprep.subr.bf16.mxu0 0
        %1204 = vmatpush1.bf16.msra.mxu0 0
        %1205 = vmatprep.subr.bf16.mxu0 0
        %1206 = vmatpush1.bf16.msra.mxu0 0
        %1207 = vmatprep.subr.bf16.mxu0 0
        %1208 = vmatpush1.bf16.msra.mxu0 0
        %1209 = vmatprep.mubr.bf16.mxu0 0
        %1210 = vmatmul.mubr.bf16.gmra.mrb[0].mxu0 %v1169
        %v1211 = vpop.f32.mrb[0].mxu0
        %v1212 = vadd.f32 0.0, %v1211
        %v1213 = vpop.f32.mrb[0].mxu0
        %v1214 = vpop.f32.mrb[0].mxu0
        %v1215 = vadd.f32 0.0, %v1214
        %v1216 = vpop.f32.mrb[0].mxu0
        %1217 = vmatprep.mubr.bf16.mxu0 0
        %1218 = vmatmul.mubr.bf16.gmra.mrb[0].mxu0 %v1171
        %v1219 = vpop.f32.mrb[0].mxu0
        %v1220 = vadd.f32 0.0, %v1219
        %v1221 = vpop.f32.mrb[0].mxu0
        %v1222 = vpop.f32.mrb[0].mxu0
        %v1223 = vadd.f32 0.0, %v1222
        %v1224 = vpop.f32.mrb[0].mxu0
        %1225 = vmatprep.mubr.bf16.mxu0 0
        %1226 = vmatmul.mubr.bf16.gmra.mrb[0].mxu0 %v1173
        %v1227 = vpop.f32.mrb[0].mxu0
        %v1228 = vadd.f32 0.0, %v1227
        %v1229 = vpop.f32.mrb[0].mxu0
        %v1230 = vpop.f32.mrb[0].mxu0
        %v1231 = vadd.f32 0.0, %v1230
        %v1232 = vpop.f32.mrb[0].mxu0
        %1233 = vmatprep.mubr.bf16.mxu0 0
        %1234 = vmatmul.mubr.bf16.gmra.mrb[0].mxu0 %v1175
        %v1235 = vpop.f32.mrb[0].mxu0
        %v1236 = vadd.f32 0.0, %v1235
        %v1237 = vpop.f32.mrb[0].mxu0
        %v1238 = vpop.f32.mrb[0].mxu0
        %v1239 = vadd.f32 0.0, %v1238
        %v1240 = vpop.f32.mrb[0].mxu0
        %1241 = vdwg.mxu0
        %vm1247 = vcmask 1043456
        %v1248 = vrot.slane %v1146, 4
        %v1249 = vrot.slane %v703, 4
        %v1250 = vsel %vm1247, %v1248, %v1249
        %v1251 = vrot.slane %v704, 4
        %v1252 = vsel %vm1247, %v1249, %v1251
        %v1253 = vrot.slane %v705, 4
        %v1254 = vsel %vm1247, %v1251, %v1253
        %v1255 = vrot.slane %v706, 4
        %v1256 = vsel %vm1247, %v1253, %v1255
        %v1261 = vunpack.c.l.b16 %v1148
        %v1262 = vunpack.c.l.b16 %v1149
        %v1263 = vunpack.c.l.b16 %v1150
        %v1264 = vunpack.c.l.b16 %v1151
        %v1265 = vpack.c.b16 %v1262, %v1261
        %v1266 = vpack.c.b16 %v1264, %v1263
        %v1270 = vsel %vm574, %v1250, 0
        %v1273 = vsel %vm574, %v1252, 0
        %v1276 = vsel %vm574, %v1254, 0
        %v1279 = vsel %vm574, %v1256, 0
        %1281 = vmatprep.subr.bf16.mxu0 0
        %1282 = vmatpush1.bf16.msra.mxu0 %v1265
        %1283 = vmatprep.subr.bf16.mxu0 0
        %1284 = vmatpush1.bf16.msra.mxu0 %v1266
        %1285 = vmatprep.subr.bf16.mxu0 0
        %1286 = vmatpush1.bf16.msra.mxu0 0
        %1287 = vmatprep.subr.bf16.mxu0 0
        %1288 = vmatpush1.bf16.msra.mxu0 0
        %1289 = vmatprep.subr.bf16.mxu0 0
        %1290 = vmatpush1.bf16.msra.mxu0 0
        %1291 = vmatprep.subr.bf16.mxu0 0
        %1292 = vmatpush1.bf16.msra.mxu0 0
        %1293 = vmatprep.subr.bf16.mxu0 0
        %1294 = vmatpush1.bf16.msra.mxu0 0
        %1295 = vmatprep.subr.bf16.mxu0 0
        %1296 = vmatpush1.bf16.msra.mxu0 0
        %1297 = vmatprep.subr.bf16.mxu0 0
        %1298 = vmatpush1.bf16.msra.mxu0 0
        %1299 = vmatprep.subr.bf16.mxu0 0
        %1300 = vmatpush1.bf16.msra.mxu0 0
        %1301 = vmatprep.subr.bf16.mxu0 0
        %1302 = vmatpush1.bf16.msra.mxu0 0
        %1303 = vmatprep.subr.bf16.mxu0 0
        %1304 = vmatpush1.bf16.msra.mxu0 0
        %1305 = vmatprep.subr.bf16.mxu0 0
        %1306 = vmatpush1.bf16.msra.mxu0 0
        %1307 = vmatprep.subr.bf16.mxu0 0
        %1308 = vmatpush1.bf16.msra.mxu0 0
        %1309 = vmatprep.subr.bf16.mxu0 0
        %1310 = vmatpush1.bf16.msra.mxu0 0
        %1311 = vmatprep.subr.bf16.mxu0 0
        %1312 = vmatpush1.bf16.msra.mxu0 0
        %1313 = vmatprep.mubr.bf16.mxu0 0
        %1314 = vmatmul.mubr.bf16.gmra.mrb[0].mxu0 %v1270
        %v1315 = vpop.f32.mrb[0].mxu0
        %v1316 = vadd.f32 %v1212, %v1315
        %v1317 = vpop.f32.mrb[0].mxu0
        %v1318 = vpop.f32.mrb[0].mxu0
        %v1319 = vadd.f32 %v1215, %v1318
        %v1320 = vpop.f32.mrb[0].mxu0
        %1321 = vmatprep.mubr.bf16.mxu0 0
        %1322 = vmatmul.mubr.bf16.gmra.mrb[0].mxu0 %v1273
        %v1323 = vpop.f32.mrb[0].mxu0
        %v1324 = vadd.f32 %v1220, %v1323
        %v1325 = vpop.f32.mrb[0].mxu0
        %v1326 = vpop.f32.mrb[0].mxu0
        %v1327 = vadd.f32 %v1223, %v1326
        %v1328 = vpop.f32.mrb[0].mxu0
        %1329 = vmatprep.mubr.bf16.mxu0 0
        %1330 = vmatmul.mubr.bf16.gmra.mrb[0].mxu0 %v1276
        %v1331 = vpop.f32.mrb[0].mxu0
        %v1332 = vadd.f32 %v1228, %v1331
        %v1333 = vpop.f32.mrb[0].mxu0
        %v1334 = vpop.f32.mrb[0].mxu0
        %v1335 = vadd.f32 %v1231, %v1334
        %v1336 = vpop.f32.mrb[0].mxu0
        %1337 = vmatprep.mubr.bf16.mxu0 0
        %1338 = vmatmul.mubr.bf16.gmra.mrb[0].mxu0 %v1279
        %v1339 = vpop.f32.mrb[0].mxu0
        %v1340 = vadd.f32 %v1236, %v1339
        %v1341 = vpop.f32.mrb[0].mxu0
        %v1342 = vpop.f32.mrb[0].mxu0
        %v1343 = vadd.f32 %v1239, %v1342
        %v1344 = vpop.f32.mrb[0].mxu0
        %1345 = vdwg.mxu0
        %v1346 = vld [vmem:[#allocation2 + $0x8] sm:$0xf0]
        %s1347 = scalar_lea.vmem [#allocation9], 112
        %v1348 = vld [vmem:[%s1347] sm:$0xf]
        %v1349 = vld [vmem:[%s1347 + $0x4] sm:$0xf]
        %v1350 = vld [vmem:[%s1347 + $0x8] sm:$0xf]
        %v1351 = vld [vmem:[%s1347 + $0xc] sm:$0xf]
        %v1357 = vrot.slane %v1346, 4
        %v1358 = vrot.slane %v964, 4
        %v1359 = vsel %vm1247, %v1357, %v1358
        %v1360 = vrot.slane %v965, 4
        %v1361 = vsel %vm1247, %v1358, %v1360
        %v1362 = vrot.slane %v966, 4
        %v1363 = vsel %vm1247, %v1360, %v1362
        %v1364 = vrot.slane %v967, 4
        %v1365 = vsel %vm1247, %v1362, %v1364
        %v1370 = vunpack.c.l.b16 %v1348
        %v1371 = vunpack.c.l.b16 %v1349
        %v1372 = vunpack.c.l.b16 %v1350
        %v1373 = vunpack.c.l.b16 %v1351
        %v1374 = vpack.c.b16 %v1371, %v1370
        %v1375 = vpack.c.b16 %v1373, %v1372
        %v1379 = vsel %vm574, %v1359, 0
        %v1382 = vsel %vm574, %v1361, 0
        %v1385 = vsel %vm574, %v1363, 0
        %v1388 = vsel %vm574, %v1365, 0
        %1390 = vmatprep.subr.bf16.mxu0 0
        %1391 = vmatpush1.bf16.msra.mxu0 %v1374
        %1392 = vmatprep.subr.bf16.mxu0 0
        %1393 = vmatpush1.bf16.msra.mxu0 %v1375
        %1394 = vmatprep.subr.bf16.mxu0 0
        %1395 = vmatpush1.bf16.msra.mxu0 0
        %1396 = vmatprep.subr.bf16.mxu0 0
        %1397 = vmatpush1.bf16.msra.mxu0 0
        %1398 = vmatprep.subr.bf16.mxu0 0
        %1399 = vmatpush1.bf16.msra.mxu0 0
        %1400 = vmatprep.subr.bf16.mxu0 0
        %1401 = vmatpush1.bf16.msra.mxu0 0
        %1402 = vmatprep.subr.bf16.mxu0 0
        %1403 = vmatpush1.bf16.msra.mxu0 0
        %1404 = vmatprep.subr.bf16.mxu0 0
        %1405 = vmatpush1.bf16.msra.mxu0 0
        %1406 = vmatprep.subr.bf16.mxu0 0
        %1407 = vmatpush1.bf16.msra.mxu0 0
        %1408 = vmatprep.subr.bf16.mxu0 0
        %1409 = vmatpush1.bf16.msra.mxu0 0
        %1410 = vmatprep.subr.bf16.mxu0 0
        %1411 = vmatpush1.bf16.msra.mxu0 0
        %1412 = vmatprep.subr.bf16.mxu0 0
        %1413 = vmatpush1.bf16.msra.mxu0 0
        %1414 = vmatprep.subr.bf16.mxu0 0
        %1415 = vmatpush1.bf16.msra.mxu0 0
        %1416 = vmatprep.subr.bf16.mxu0 0
        %1417 = vmatpush1.bf16.msra.mxu0 0
        %1418 = vmatprep.subr.bf16.mxu0 0
        %1419 = vmatpush1.bf16.msra.mxu0 0
        %1420 = vmatprep.subr.bf16.mxu0 0
        %1421 = vmatpush1.bf16.msra.mxu0 0
        %1422 = vmatprep.mubr.bf16.mxu0 0
        %1423 = vmatmul.mubr.bf16.gmra.mrb[0].mxu0 %v1379
        %v1424 = vpop.f32.mrb[0].mxu0
        %v1425 = vadd.f32 0.0, %v1424
        %v1426 = vpop.f32.mrb[0].mxu0
        %v1427 = vpop.f32.mrb[0].mxu0
        %v1428 = vadd.f32 0.0, %v1427
        %v1429 = vpop.f32.mrb[0].mxu0
        %1430 = vmatprep.mubr.bf16.mxu0 0
        %1431 = vmatmul.mubr.bf16.gmra.mrb[0].mxu0 %v1382
        %v1432 = vpop.f32.mrb[0].mxu0
        %v1433 = vadd.f32 0.0, %v1432
        %v1434 = vpop.f32.mrb[0].mxu0
        %v1435 = vpop.f32.mrb[0].mxu0
        %v1436 = vadd.f32 0.0, %v1435
        %v1437 = vpop.f32.mrb[0].mxu0
        %1438 = vmatprep.mubr.bf16.mxu0 0
        %1439 = vmatmul.mubr.bf16.gmra.mrb[0].mxu0 %v1385
        %v1440 = vpop.f32.mrb[0].mxu0
        %v1441 = vadd.f32 0.0, %v1440
        %v1442 = vpop.f32.mrb[0].mxu0
        %v1443 = vpop.f32.mrb[0].mxu0
        %v1444 = vadd.f32 0.0, %v1443
        %v1445 = vpop.f32.mrb[0].mxu0
        %1446 = vmatprep.mubr.bf16.mxu0 0
        %1447 = vmatmul.mubr.bf16.gmra.mrb[0].mxu0 %v1388
        %v1448 = vpop.f32.mrb[0].mxu0
        %v1449 = vadd.f32 0.0, %v1448
        %v1450 = vpop.f32.mrb[0].mxu0
        %v1451 = vpop.f32.mrb[0].mxu0
        %v1452 = vadd.f32 0.0, %v1451
        %v1453 = vpop.f32.mrb[0].mxu0
        %1454 = vdwg.mxu0
        %v1455 = vadd.f32 %v1316, %v1425
        %v1456 = vadd.f32 %v1319, %v1428
        %v1457 = vadd.f32 %v1324, %v1433
        %v1458 = vadd.f32 %v1327, %v1436
        %v1459 = vadd.f32 %v1332, %v1441
        %v1460 = vadd.f32 %v1335, %v1444
        %v1461 = vadd.f32 %v1340, %v1449
        %v1462 = vadd.f32 %v1343, %v1452
        %v1463 = vadd.f32 %v1138, %v1455
        %v1464 = vadd.f32 %v1139, %v1456
        %v1465 = vadd.f32 %v1140, %v1457
        %v1466 = vadd.f32 %v1141, %v1458
        %v1467 = vadd.f32 %v1142, %v1459
        %v1468 = vadd.f32 %v1143, %v1460
        %v1469 = vadd.f32 %v1144, %v1461
        %v1470 = vadd.f32 %v1145, %v1462
        %v1471 = vld [vmem:[#allocation2 + $0x20] sm:$0x1f]
        %s1472 = scalar_lea.vmem [#allocation9], 32
        %v1473 = vld [vmem:[%s1472] sm:$0xf]
        %v1474 = vld [vmem:[%s1472 + $0x4] sm:$0xf]
        %v1475 = vld [vmem:[%s1472 + $0x8] sm:$0xf]
        %v1476 = vld [vmem:[%s1472 + $0xc] sm:$0xf]
        %v1477 = vld [vmem:[#allocation2 + $0x8] sm:$0xff]
        %v1478 = vld [vmem:[#allocation2 + $0x28] sm:$0x1]
        %s1479 = scalar_lea.vmem [#allocation9], 80
        %v1480 = vld [vmem:[%s1479] sm:$0xf]
        %v1481 = vld [vmem:[%s1479 + $0x4] sm:$0xf]
        %v1482 = vld [vmem:[%s1479 + $0x8] sm:$0xf]
        %v1483 = vld [vmem:[%s1479 + $0xc] sm:$0xf]
        %vm1484 = vsmask.f32 7424
        %v1486 = vshrl.u32 %v1477, 16
        %v1488 = vshll.u32 %v1477, 16
        %v1490 = vrot.slane %v1488, 1
        %v1491 = vor.u32 %v1486, %v1490
        %v1492 = vrot.slane %v985, 1
        %v1493 = vsel %vm1484, %v1491, %v1492
        %v1494 = vor.u32 %v982, %v1492
        %v1495 = vrot.slane %v994, 1
        %v1496 = vsel %vm1484, %v1494, %v1495
        %v1497 = vor.u32 %v991, %v1495
        %v1498 = vrot.slane %v1003, 1
        %v1499 = vsel %vm1484, %v1497, %v1498
        %v1500 = vor.u32 %v1000, %v1498
        %v1502 = vshll.u32 %v1478, 16
        %v1504 = vrot.slane %v1502, 1
        %v1505 = vsel %vm1484, %v1500, %v1504
        %v1510 = vunpack.c.l.b16 %v1480
        %v1511 = vunpack.c.l.b16 %v1481
        %v1512 = vunpack.c.l.b16 %v1482
        %v1513 = vunpack.c.l.b16 %v1483
        %v1514 = vpack.c.b16 %v1511, %v1510
        %v1515 = vpack.c.b16 %v1513, %v1512
        %v1519 = vsel %vm574, %v1493, 0
        %v1522 = vsel %vm574, %v1496, 0
        %v1525 = vsel %vm574, %v1499, 0
        %v1528 = vsel %vm574, %v1505, 0
        %1530 = vmatprep.subr.bf16.mxu0 0
        %1531 = vmatpush1.bf16.msra.mxu0 %v1514
        %1532 = vmatprep.subr.bf16.mxu0 0
        %1533 = vmatpush1.bf16.msra.mxu0 %v1515
        %1534 = vmatprep.subr.bf16.mxu0 0
        %1535 = vmatpush1.bf16.msra.mxu0 0
        %1536 = vmatprep.subr.bf16.mxu0 0
        %1537 = vmatpush1.bf16.msra.mxu0 0
        %1538 = vmatprep.subr.bf16.mxu0 0
        %1539 = vmatpush1.bf16.msra.mxu0 0
        %1540 = vmatprep.subr.bf16.mxu0 0
        %1541 = vmatpush1.bf16.msra.mxu0 0
        %1542 = vmatprep.subr.bf16.mxu0 0
        %1543 = vmatpush1.bf16.msra.mxu0 0
        %1544 = vmatprep.subr.bf16.mxu0 0
        %1545 = vmatpush1.bf16.msra.mxu0 0
        %1546 = vmatprep.subr.bf16.mxu0 0
        %1547 = vmatpush1.bf16.msra.mxu0 0
        %1548 = vmatprep.subr.bf16.mxu0 0
        %1549 = vmatpush1.bf16.msra.mxu0 0
        %1550 = vmatprep.subr.bf16.mxu0 0
        %1551 = vmatpush1.bf16.msra.mxu0 0
        %1552 = vmatprep.subr.bf16.mxu0 0
        %1553 = vmatpush1.bf16.msra.mxu0 0
        %1554 = vmatprep.subr.bf16.mxu0 0
        %1555 = vmatpush1.bf16.msra.mxu0 0
        %1556 = vmatprep.subr.bf16.mxu0 0
        %1557 = vmatpush1.bf16.msra.mxu0 0
        %1558 = vmatprep.subr.bf16.mxu0 0
        %1559 = vmatpush1.bf16.msra.mxu0 0
        %1560 = vmatprep.subr.bf16.mxu0 0
        %1561 = vmatpush1.bf16.msra.mxu0 0
        %1562 = vmatprep.mubr.bf16.mxu0 0
        %1563 = vmatmul.mubr.bf16.gmra.mrb[0].mxu0 %v1519
        %v1564 = vpop.f32.mrb[0].mxu0
        %v1565 = vadd.f32 0.0, %v1564
        %v1566 = vpop.f32.mrb[0].mxu0
        %v1567 = vpop.f32.mrb[0].mxu0
        %v1568 = vadd.f32 0.0, %v1567
        %v1569 = vpop.f32.mrb[0].mxu0
        %1570 = vmatprep.mubr.bf16.mxu0 0
        %1571 = vmatmul.mubr.bf16.gmra.mrb[0].mxu0 %v1522
        %v1572 = vpop.f32.mrb[0].mxu0
        %v1573 = vadd.f32 0.0, %v1572
        %v1574 = vpop.f32.mrb[0].mxu0
        %v1575 = vpop.f32.mrb[0].mxu0
        %v1576 = vadd.f32 0.0, %v1575
        %v1577 = vpop.f32.mrb[0].mxu0
        %1578 = vmatprep.mubr.bf16.mxu0 0
        %1579 = vmatmul.mubr.bf16.gmra.mrb[0].mxu0 %v1525
        %v1580 = vpop.f32.mrb[0].mxu0
        %v1581 = vadd.f32 0.0, %v1580
        %v1582 = vpop.f32.mrb[0].mxu0
        %v1583 = vpop.f32.mrb[0].mxu0
        %v1584 = vadd.f32 0.0, %v1583
        %v1585 = vpop.f32.mrb[0].mxu0
        %1586 = vmatprep.mubr.bf16.mxu0 0
        %1587 = vmatmul.mubr.bf16.gmra.mrb[0].mxu0 %v1528
        %v1588 = vpop.f32.mrb[0].mxu0
        %v1589 = vadd.f32 0.0, %v1588
        %v1590 = vpop.f32.mrb[0].mxu0
        %v1591 = vpop.f32.mrb[0].mxu0
        %v1592 = vadd.f32 0.0, %v1591
        %v1593 = vpop.f32.mrb[0].mxu0
        %1594 = vdwg.mxu0
        %vm1595 = vsmask.f32 3328
        %v1597 = vshrl.u32 %v1146, 16
        %v1599 = vrot.slane %v1597, 4
        %v1600 = vshll.u32 %v1146, 16
        %v1602 = vrot.slane %v1600, 5
        %v1603 = vor.u32 %v1599, %v1602
        %v1604 = vrot.slane %v724, 4
        %v1605 = vrot.slane %v727, 5
        %v1606 = vor.u32 %v1604, %v1605
        %v1607 = vsel %vm1595, %v1603, %v1606
        %v1608 = vrot.slane %v732, 4
        %v1609 = vrot.slane %v735, 5
        %v1610 = vor.u32 %v1608, %v1609
        %v1611 = vsel %vm1595, %v1606, %v1610
        %v1612 = vrot.slane %v740, 4
        %v1613 = vrot.slane %v743, 5
        %v1614 = vor.u32 %v1612, %v1613
        %v1615 = vsel %vm1595, %v1610, %v1614
        %v1617 = vshrl.u32 %v1471, 16
        %v1619 = vrot.slane %v1617, 4
        %v1620 = vshll.u32 %v1471, 16
        %v1622 = vrot.slane %v1620, 5
        %v1623 = vor.u32 %v1619, %v1622
        %v1624 = vsel %vm1595, %v1614, %v1623
        %v1629 = vunpack.c.l.b16 %v1473
        %v1630 = vunpack.c.l.b16 %v1474
        %v1631 = vunpack.c.l.b16 %v1475
        %v1632 = vunpack.c.l.b16 %v1476
        %v1633 = vpack.c.b16 %v1630, %v1629
        %v1634 = vpack.c.b16 %v1632, %v1631
        %v1638 = vsel %vm574, %v1607, 0
        %v1641 = vsel %vm574, %v1611, 0
        %v1644 = vsel %vm574, %v1615, 0
        %v1647 = vsel %vm574, %v1624, 0
        %1649 = vmatprep.subr.bf16.mxu0 0
        %1650 = vmatpush1.bf16.msra.mxu0 %v1633
        %1651 = vmatprep.subr.bf16.mxu0 0
        %1652 = vmatpush1.bf16.msra.mxu0 %v1634
        %1653 = vmatprep.subr.bf16.mxu0 0
        %1654 = vmatpush1.bf16.msra.mxu0 0
        %1655 = vmatprep.subr.bf16.mxu0 0
        %1656 = vmatpush1.bf16.msra.mxu0 0
        %1657 = vmatprep.subr.bf16.mxu0 0
        %1658 = vmatpush1.bf16.msra.mxu0 0
        %1659 = vmatprep.subr.bf16.mxu0 0
        %1660 = vmatpush1.bf16.msra.mxu0 0
        %1661 = vmatprep.subr.bf16.mxu0 0
        %1662 = vmatpush1.bf16.msra.mxu0 0
        %1663 = vmatprep.subr.bf16.mxu0 0
        %1664 = vmatpush1.bf16.msra.mxu0 0
        %1665 = vmatprep.subr.bf16.mxu0 0
        %1666 = vmatpush1.bf16.msra.mxu0 0
        %1667 = vmatprep.subr.bf16.mxu0 0
        %1668 = vmatpush1.bf16.msra.mxu0 0
        %1669 = vmatprep.subr.bf16.mxu0 0
        %1670 = vmatpush1.bf16.msra.mxu0 0
        %1671 = vmatprep.subr.bf16.mxu0 0
        %1672 = vmatpush1.bf16.msra.mxu0 0
        %1673 = vmatprep.subr.bf16.mxu0 0
        %1674 = vmatpush1.bf16.msra.mxu0 0
        %1675 = vmatprep.subr.bf16.mxu0 0
        %1676 = vmatpush1.bf16.msra.mxu0 0
        %1677 = vmatprep.subr.bf16.mxu0 0
        %1678 = vmatpush1.bf16.msra.mxu0 0
        %1679 = vmatprep.subr.bf16.mxu0 0
        %1680 = vmatpush1.bf16.msra.mxu0 0
        %1681 = vmatprep.mubr.bf16.mxu0 0
        %1682 = vmatmul.mubr.bf16.gmra.mrb[0].mxu0 %v1638
        %v1683 = vpop.f32.mrb[0].mxu0
        %v1684 = vadd.f32 %v1565, %v1683
        %v1685 = vpop.f32.mrb[0].mxu0
        %v1686 = vpop.f32.mrb[0].mxu0
        %v1687 = vadd.f32 %v1568, %v1686
        %v1688 = vpop.f32.mrb[0].mxu0
        %1689 = vmatprep.mubr.bf16.mxu0 0
        %1690 = vmatmul.mubr.bf16.gmra.mrb[0].mxu0 %v1641
        %v1691 = vpop.f32.mrb[0].mxu0
        %v1692 = vadd.f32 %v1573, %v1691
        %v1693 = vpop.f32.mrb[0].mxu0
        %v1694 = vpop.f32.mrb[0].mxu0
        %v1695 = vadd.f32 %v1576, %v1694
        %v1696 = vpop.f32.mrb[0].mxu0
        %1697 = vmatprep.mubr.bf16.mxu0 0
        %1698 = vmatmul.mubr.bf16.gmra.mrb[0].mxu0 %v1644
        %v1699 = vpop.f32.mrb[0].mxu0
        %v1700 = vadd.f32 %v1581, %v1699
        %v1701 = vpop.f32.mrb[0].mxu0
        %v1702 = vpop.f32.mrb[0].mxu0
        %v1703 = vadd.f32 %v1584, %v1702
        %v1704 = vpop.f32.mrb[0].mxu0
        %1705 = vmatprep.mubr.bf16.mxu0 0
        %1706 = vmatmul.mubr.bf16.gmra.mrb[0].mxu0 %v1647
        %v1707 = vpop.f32.mrb[0].mxu0
        %v1708 = vadd.f32 %v1589, %v1707
        %v1709 = vpop.f32.mrb[0].mxu0
        %v1710 = vpop.f32.mrb[0].mxu0
        %v1711 = vadd.f32 %v1592, %v1710
        %v1712 = vpop.f32.mrb[0].mxu0
        %1713 = vdwg.mxu0
        %v1714 = vld [vmem:[#allocation2 + $0x28] sm:$0x1f]
        %s1715 = scalar_lea.vmem [#allocation9], 128
        %v1716 = vld [vmem:[%s1715] sm:$0xf]
        %v1717 = vld [vmem:[%s1715 + $0x4] sm:$0xf]
        %v1718 = vld [vmem:[%s1715 + $0x8] sm:$0xf]
        %v1719 = vld [vmem:[%s1715 + $0xc] sm:$0xf]
        %v1721 = vshrl.u32 %v1346, 16
        %v1723 = vrot.slane %v1721, 4
        %v1724 = vshll.u32 %v1346, 16
        %v1726 = vrot.slane %v1724, 5
        %v1727 = vor.u32 %v1723, %v1726
        %v1728 = vrot.slane %v982, 4
        %v1729 = vrot.slane %v985, 5
        %v1730 = vor.u32 %v1728, %v1729
        %v1731 = vsel %vm1595, %v1727, %v1730
        %v1732 = vrot.slane %v991, 4
        %v1733 = vrot.slane %v994, 5
        %v1734 = vor.u32 %v1732, %v1733
        %v1735 = vsel %vm1595, %v1730, %v1734
        %v1736 = vrot.slane %v1000, 4
        %v1737 = vrot.slane %v1003, 5
        %v1738 = vor.u32 %v1736, %v1737
        %v1739 = vsel %vm1595, %v1734, %v1738
        %v1741 = vshrl.u32 %v1714, 16
        %v1743 = vrot.slane %v1741, 4
        %v1744 = vshll.u32 %v1714, 16
        %v1746 = vrot.slane %v1744, 5
        %v1747 = vor.u32 %v1743, %v1746
        %v1748 = vsel %vm1595, %v1738, %v1747
        %v1753 = vunpack.c.l.b16 %v1716
        %v1754 = vunpack.c.l.b16 %v1717
        %v1755 = vunpack.c.l.b16 %v1718
        %v1756 = vunpack.c.l.b16 %v1719
        %v1757 = vpack.c.b16 %v1754, %v1753
        %v1758 = vpack.c.b16 %v1756, %v1755
        %v1762 = vsel %vm574, %v1731, 0
        %v1765 = vsel %vm574, %v1735, 0
        %v1768 = vsel %vm574, %v1739, 0
        %v1771 = vsel %vm574, %v1748, 0
        %1773 = vmatprep.subr.bf16.mxu0 0
        %1774 = vmatpush1.bf16.msra.mxu0 %v1757
        %1775 = vmatprep.subr.bf16.mxu0 0
        %1776 = vmatpush1.bf16.msra.mxu0 %v1758
        %1777 = vmatprep.subr.bf16.mxu0 0
        %1778 = vmatpush1.bf16.msra.mxu0 0
        %1779 = vmatprep.subr.bf16.mxu0 0
        %1780 = vmatpush1.bf16.msra.mxu0 0
        %1781 = vmatprep.subr.bf16.mxu0 0
        %1782 = vmatpush1.bf16.msra.mxu0 0
        %1783 = vmatprep.subr.bf16.mxu0 0
        %1784 = vmatpush1.bf16.msra.mxu0 0
        %1785 = vmatprep.subr.bf16.mxu0 0
        %1786 = vmatpush1.bf16.msra.mxu0 0
        %1787 = vmatprep.subr.bf16.mxu0 0
        %1788 = vmatpush1.bf16.msra.mxu0 0
        %1789 = vmatprep.subr.bf16.mxu0 0
        %1790 = vmatpush1.bf16.msra.mxu0 0
        %1791 = vmatprep.subr.bf16.mxu0 0
        %1792 = vmatpush1.bf16.msra.mxu0 0
        %1793 = vmatprep.subr.bf16.mxu0 0
        %1794 = vmatpush1.bf16.msra.mxu0 0
        %1795 = vmatprep.subr.bf16.mxu0 0
        %1796 = vmatpush1.bf16.msra.mxu0 0
        %1797 = vmatprep.subr.bf16.mxu0 0
        %1798 = vmatpush1.bf16.msra.mxu0 0
        %1799 = vmatprep.subr.bf16.mxu0 0
        %1800 = vmatpush1.bf16.msra.mxu0 0
        %1801 = vmatprep.subr.bf16.mxu0 0
        %1802 = vmatpush1.bf16.msra.mxu0 0
        %1803 = vmatprep.subr.bf16.mxu0 0
        %1804 = vmatpush1.bf16.msra.mxu0 0
        %1805 = vmatprep.mubr.bf16.mxu0 0
        %1806 = vmatmul.mubr.bf16.gmra.mrb[0].mxu0 %v1762
        %v1807 = vpop.f32.mrb[0].mxu0
        %v1808 = vadd.f32 0.0, %v1807
        %v1809 = vpop.f32.mrb[0].mxu0
        %v1810 = vpop.f32.mrb[0].mxu0
        %v1811 = vadd.f32 0.0, %v1810
        %v1812 = vpop.f32.mrb[0].mxu0
        %1813 = vmatprep.mubr.bf16.mxu0 0
        %1814 = vmatmul.mubr.bf16.gmra.mrb[0].mxu0 %v1765
        %v1815 = vpop.f32.mrb[0].mxu0
        %v1816 = vadd.f32 0.0, %v1815
        %v1817 = vpop.f32.mrb[0].mxu0
        %v1818 = vpop.f32.mrb[0].mxu0
        %v1819 = vadd.f32 0.0, %v1818
        %v1820 = vpop.f32.mrb[0].mxu0
        %1821 = vmatprep.mubr.bf16.mxu0 0
        %1822 = vmatmul.mubr.bf16.gmra.mrb[0].mxu0 %v1768
        %v1823 = vpop.f32.mrb[0].mxu0
        %v1824 = vadd.f32 0.0, %v1823
        %v1825 = vpop.f32.mrb[0].mxu0
        %v1826 = vpop.f32.mrb[0].mxu0
        %v1827 = vadd.f32 0.0, %v1826
        %v1828 = vpop.f32.mrb[0].mxu0
        %1829 = vmatprep.mubr.bf16.mxu0 0
        %1830 = vmatmul.mubr.bf16.gmra.mrb[0].mxu0 %v1771
        %v1831 = vpop.f32.mrb[0].mxu0
        %v1832 = vadd.f32 0.0, %v1831
        %v1833 = vpop.f32.mrb[0].mxu0
        %v1834 = vpop.f32.mrb[0].mxu0
        %v1835 = vadd.f32 0.0, %v1834
        %v1836 = vpop.f32.mrb[0].mxu0
        %1837 = vdwg.mxu0
        %v1838 = vadd.f32 %v1684, %v1808
        %v1839 = vadd.f32 %v1687, %v1811
        %v1840 = vadd.f32 %v1692, %v1816
        %v1841 = vadd.f32 %v1695, %v1819
        %v1842 = vadd.f32 %v1700, %v1824
        %v1843 = vadd.f32 %v1703, %v1827
        %v1844 = vadd.f32 %v1708, %v1832
        %v1845 = vadd.f32 %v1711, %v1835
        %v1846 = vsel %vm694, 1, 0
        %v1847 = vsel %vm695, 1, 0
        %v1848 = vsel %vm696, 1, 0
        %v1849 = vsel %vm697, 1, 0
        %v1850 = vsel %vm698, 1, 0
        %v1851 = vsel %vm699, 1, 0
        %v1852 = vsel %vm700, 1, 0
        %v1853 = vsel %vm701, 1, 0
        %vm1854 = vcmp.eq.s32.totalorder %v1846, 1
        %vm1855 = vcmp.eq.s32.totalorder %v1847, 1
        %vm1856 = vcmp.eq.s32.totalorder %v1848, 1
        %vm1857 = vcmp.eq.s32.totalorder %v1849, 1
        %vm1858 = vcmp.eq.s32.totalorder %v1850, 1
        %vm1859 = vcmp.eq.s32.totalorder %v1851, 1
        %vm1860 = vcmp.eq.s32.totalorder %v1852, 1
        %vm1861 = vcmp.eq.s32.totalorder %v1853, 1
        %v1862 = vsel %vm1854, %v1838, 0.0
        %v1863 = vsel %vm1855, %v1839, 0.0
        %v1864 = vsel %vm1856, %v1840, 0.0
        %v1865 = vsel %vm1857, %v1841, 0.0
        %v1866 = vsel %vm1858, %v1842, 0.0
        %v1867 = vsel %vm1859, %v1843, 0.0
        %v1868 = vsel %vm1860, %v1844, 0.0
        %v1869 = vsel %vm1861, %v1845, 0.0
        %v1870 = vadd.f32 %v1463, %v1862
        %v1871 = vadd.f32 %v1464, %v1863
        %v1872 = vadd.f32 %v1465, %v1864
        %v1873 = vadd.f32 %v1466, %v1865
        %v1874 = vadd.f32 %v1467, %v1866
        %v1875 = vadd.f32 %v1468, %v1867
        %v1876 = vadd.f32 %v1469, %v1868
        %v1877 = vadd.f32 %v1470, %v1869
        %v1878 = vld [vmem:[#allocation11] sm:$0x1]
        %v1880 = vlaneseq
        %v1881 = vshrl.u32 %v1880, 7
        %v1882 = vsub.s32 0, %v1881
        %v1883 = vrot.slane %v1878, %v1882
        %v1885 = vadd.f32 %v1870, %v1883
        %v1886 = vadd.f32 %v1871, %v1883
        %v1887 = vadd.f32 %v1872, %v1883
        %v1888 = vadd.f32 %v1873, %v1883
        %v1889 = vadd.f32 %v1874, %v1883
        %v1890 = vadd.f32 %v1875, %v1883
        %v1891 = vadd.f32 %v1876, %v1883
        %v1892 = vadd.f32 %v1877, %v1883
        %v1893 = vmax.f32 %v1885, 0.0
        %v1894 = vmax.f32 %v1886, 0.0
        %v1895 = vmax.f32 %v1887, 0.0
        %v1896 = vmax.f32 %v1888, 0.0
        %v1897 = vmax.f32 %v1889, 0.0
        %v1898 = vmax.f32 %v1890, 0.0
        %v1899 = vmax.f32 %v1891, 0.0
        %v1900 = vmax.f32 %v1892, 0.0
        %v1901 = vpack.c.bf16 %v1894, %v1893
        %v1902 = vpack.c.bf16 %v1896, %v1895
        %v1903 = vpack.c.bf16 %v1898, %v1897
        %v1904 = vpack.c.bf16 %v1900, %v1899
        %v1905 = vld [vmem:[%s337] sm:$0xf]
        %v1906 = vld [vmem:[%s337 + $0x4] sm:$0xf]
        %v1907 = vld [vmem:[%s337 + $0x8] sm:$0xf]
        %v1908 = vld [vmem:[%s337 + $0xc] sm:$0xf]
        %v1909 = vld [vmem:[%s337 + $0x10] sm:$0xf]
        %v1910 = vld [vmem:[%s337 + $0x14] sm:$0xf]
        %v1911 = vld [vmem:[%s337 + $0x18] sm:$0xf]
        %v1912 = vld [vmem:[%s337 + $0x1c] sm:$0xf]
        %v1913 = vunpack.c.l.bf16 %v1905
        %v1914 = vunpack.c.l.bf16 %v1906
        %v1915 = vunpack.c.l.bf16 %v1907
        %v1916 = vunpack.c.l.bf16 %v1908
        %v1917 = vunpack.c.l.bf16 %v1909
        %v1918 = vunpack.c.l.bf16 %v1910
        %v1919 = vunpack.c.l.bf16 %v1911
        %v1920 = vunpack.c.l.bf16 %v1912
        %v1921 = vld [vmem:[#allocation12] sm:$0xf]
        %v1922 = vld [vmem:[#allocation12 + $0x4] sm:$0xf]
        %v1923 = vld [vmem:[#allocation12 + $0x8] sm:$0xf]
        %v1924 = vld [vmem:[#allocation12 + $0xc] sm:$0xf]
        %v1925 = vld [vmem:[#allocation14] sm:$0x1]
        %v1927 = vlaneseq
        %v1928 = vshrl.u32 %v1927, 7
        %v1929 = vsub.s32 0, %v1928
        %v1930 = vrot.slane %v1925, %v1929
        %v1936 = vunpack.c.l.b16 %v1921
        %v1937 = vunpack.c.l.b16 %v1922
        %v1938 = vunpack.c.l.b16 %v1923
        %v1939 = vunpack.c.l.b16 %v1924
        %v1940 = vpack.c.b16 %v1937, %v1936
        %v1941 = vpack.c.b16 %v1939, %v1938
        %v1945 = vsel %vm574, %v1901, 0
        %v1948 = vsel %vm574, %v1902, 0
        %v1951 = vsel %vm574, %v1903, 0
        %v1954 = vsel %vm574, %v1904, 0
        %1956 = vmatprep.subr.bf16.mxu0 0
        %1957 = vmatpush1.bf16.msra.mxu0 %v1940
        %1958 = vmatprep.subr.bf16.mxu0 0
        %1959 = vmatpush1.bf16.msra.mxu0 %v1941
        %1960 = vmatprep.subr.bf16.mxu0 0
        %1961 = vmatpush1.bf16.msra.mxu0 0
        %1962 = vmatprep.subr.bf16.mxu0 0
        %1963 = vmatpush1.bf16.msra.mxu0 0
        %1964 = vmatprep.subr.bf16.mxu0 0
        %1965 = vmatpush1.bf16.msra.mxu0 0
        %1966 = vmatprep.subr.bf16.mxu0 0
        %1967 = vmatpush1.bf16.msra.mxu0 0
        %1968 = vmatprep.subr.bf16.mxu0 0
        %1969 = vmatpush1.bf16.msra.mxu0 0
        %1970 = vmatprep.subr.bf16.mxu0 0
        %1971 = vmatpush1.bf16.msra.mxu0 0
        %1972 = vmatprep.subr.bf16.mxu0 0
        %1973 = vmatpush1.bf16.msra.mxu0 0
        %1974 = vmatprep.subr.bf16.mxu0 0
        %1975 = vmatpush1.bf16.msra.mxu0 0
        %1976 = vmatprep.subr.bf16.mxu0 0
        %1977 = vmatpush1.bf16.msra.mxu0 0
        %1978 = vmatprep.subr.bf16.mxu0 0
        %1979 = vmatpush1.bf16.msra.mxu0 0
        %1980 = vmatprep.subr.bf16.mxu0 0
        %1981 = vmatpush1.bf16.msra.mxu0 0
        %1982 = vmatprep.subr.bf16.mxu0 0
        %1983 = vmatpush1.bf16.msra.mxu0 0
        %1984 = vmatprep.subr.bf16.mxu0 0
        %1985 = vmatpush1.bf16.msra.mxu0 0
        %1986 = vmatprep.subr.bf16.mxu0 0
        %1987 = vmatpush1.bf16.msra.mxu0 0
        %1988 = vmatprep.mubr.bf16.mxu0 0
        %1989 = vmatmul.mubr.bf16.gmra.mrb[0].mxu0 %v1945
        %v1990 = vpop.f32.mrb[0].mxu0
        %v1991 = vadd.f32 %v1930, %v1990
        %v1992 = vpop.f32.mrb[0].mxu0
        %v1993 = vpop.f32.mrb[0].mxu0
        %v1994 = vadd.f32 %v1930, %v1993
        %v1995 = vpop.f32.mrb[0].mxu0
        %1996 = vmatprep.mubr.bf16.mxu0 0
        %1997 = vmatmul.mubr.bf16.gmra.mrb[0].mxu0 %v1948
        %v1998 = vpop.f32.mrb[0].mxu0
        %v1999 = vadd.f32 %v1930, %v1998
        %v2000 = vpop.f32.mrb[0].mxu0
        %v2001 = vpop.f32.mrb[0].mxu0
        %v2002 = vadd.f32 %v1930, %v2001
        %v2003 = vpop.f32.mrb[0].mxu0
        %2004 = vmatprep.mubr.bf16.mxu0 0
        %2005 = vmatmul.mubr.bf16.gmra.mrb[0].mxu0 %v1951
        %v2006 = vpop.f32.mrb[0].mxu0
        %v2007 = vadd.f32 %v1930, %v2006
        %v2008 = vpop.f32.mrb[0].mxu0
        %v2009 = vpop.f32.mrb[0].mxu0
        %v2010 = vadd.f32 %v1930, %v2009
        %v2011 = vpop.f32.mrb[0].mxu0
        %2012 = vmatprep.mubr.bf16.mxu0 0
        %2013 = vmatmul.mubr.bf16.gmra.mrb[0].mxu0 %v1954
        %v2014 = vpop.f32.mrb[0].mxu0
        %v2015 = vadd.f32 %v1930, %v2014
        %v2016 = vpop.f32.mrb[0].mxu0
        %v2017 = vpop.f32.mrb[0].mxu0
        %v2018 = vadd.f32 %v1930, %v2017
        %v2019 = vpop.f32.mrb[0].mxu0
        %2020 = vdwg.mxu0
        %v2021 = vadd.f32 %v1991, %v1913
        %v2022 = vadd.f32 %v1994, %v1914
        %v2023 = vadd.f32 %v1999, %v1915
        %v2024 = vadd.f32 %v2002, %v1916
        %v2025 = vadd.f32 %v2007, %v1917
        %v2026 = vadd.f32 %v2010, %v1918
        %v2027 = vadd.f32 %v2015, %v1919
        %v2028 = vadd.f32 %v2018, %v1920
        %v2029 = vmax.f32 %v2021, 0.0
        %v2030 = vmax.f32 %v2022, 0.0
        %v2031 = vmax.f32 %v2023, 0.0
        %v2032 = vmax.f32 %v2024, 0.0
        %v2033 = vmax.f32 %v2025, 0.0
        %v2034 = vmax.f32 %v2026, 0.0
        %v2035 = vmax.f32 %v2027, 0.0
        %v2036 = vmax.f32 %v2028, 0.0
        %v2037 = vpack.c.bf16 %v2030, %v2029
        %v2038 = vpack.c.bf16 %v2032, %v2031
        %v2039 = vpack.c.bf16 %v2034, %v2033
        %v2040 = vpack.c.bf16 %v2036, %v2035
        %v2045 = vunpack.c.l.b16 %v2037
        %v2046 = vunpack.c.h.b16 %v2037
        %v2047 = vunpack.c.l.b16 %v2038
        %v2048 = vunpack.c.h.b16 %v2038
        %v2049 = vunpack.c.l.b16 %v2039
        %v2050 = vunpack.c.h.b16 %v2039
        %v2051 = vunpack.c.l.b16 %v2040
        %v2052 = vunpack.c.h.b16 %v2040
        %v2053 = vpack.c.b16 %v2045, %v2045
        %v2054 = vpack.c.b16 %v2046, %v2046
        %v2055 = vpack.c.b16 %v2047, %v2047
        %v2056 = vpack.c.b16 %v2048, %v2048
        %v2057 = vpack.c.b16 %v2049, %v2049
        %v2058 = vpack.c.b16 %v2050, %v2050
        %v2059 = vpack.c.b16 %v2051, %v2051
        %v2060 = vpack.c.b16 %v2052, %v2052
        %2069 = vst [vmem:[%s391] sm:$0xf] %v2053
        %2070 = vst [vmem:[%s391 + $0x4] sm:$0xf] %v2054
        %2071 = vst [vmem:[%s391 + $0x8] sm:$0xf] %v2055
        %2072 = vst [vmem:[%s391 + $0xc] sm:$0xf] %v2056
        %2073 = vst [vmem:[%s391 + $0x10] sm:$0xf] %v2057
        %2074 = vst [vmem:[%s391 + $0x14] sm:$0xf] %v2058
        %2075 = vst [vmem:[%s391 + $0x18] sm:$0xf] %v2059
        %2076 = vst [vmem:[%s391 + $0x1c] sm:$0xf] %v2060
        %s2077 = sand.u32 %s201, 1
        %s2078 = scalar_lea.sflag [#allocation5], %s2077
        %s2079 = sand.u32 %s201, 1
        %s2080 = smul.addr %s2079, 32
        %s2081 = scalar_lea.vmem [#allocation15], %s2080
        // Predicated region
        $region77: #{us_bottleneck_forward.1} parent=47 // pred_check
          %p2082 = pneg %p211
        $region78: #{us_bottleneck_forward.1} parent=47 // pred_check_branch
          %2084 = sbr.rel (%p2082) target = $region80
        $region79: #{us_bottleneck_forward.1} parent=47 // pred_region
          %s2085 = smul.u32 8, %s32
          %s2087 = ssub.s32 512, 512
          %2088 = vsyncadd %s2078, %s2087
          %s2089 = smul.addr %s31, 8
          %s2090 = sadd.s32 %s2085, %s2089
          %s2091 = smul.addr %s2090, 64
          %s2092 = scalar_lea.hbm %s7, %s2091
          %s2093 = sshll.u32 %s2081, 4
          %s2094 = int_to_ptr.vmem [resolvable:$true] %s2093
          %2099 = dma.vmem_to_hbm [thread:$0]  %s2094, 512, %s2092, %s2078, 64, 64, 4
        $region80: #{us_bottleneck_forward.1} parent=47 // pred_fallthru
          _
      $region48: #{us_bottleneck_forward.1} parent=5 // pred_fallthru
        _
      %p2100 = scmp.le.s32.totalorder 2, %s22
      // Predicated region
      $region81: #{us_bottleneck_forward.1} parent=5 // pred_check
        %p2101 = pneg %p2100
      $region82: #{us_bottleneck_forward.1} parent=5 // pred_check_branch
        %2103 = sbr.rel (%p2101) target = $region84
      $region83: #{us_bottleneck_forward.1} parent=5 // pred_region
        %s2104 = ssub.s32 %s22, 2
        // Predicated region
        $region85: #{us_bottleneck_forward.1} parent=83 // pred_check
          %p2105 = pneg %p217
        $region86: #{us_bottleneck_forward.1} parent=83 // pred_check_branch
          %2107 = sbr.rel (%p2105) target = $region88
        $region87: #{us_bottleneck_forward.1} parent=83 // pred_region
          %s2108 = sand.u32 %s202, 1
          %s2109 = scalar_lea.sflag [#allocation5], %s2108
          %s2110 = sand.u32 %s202, 1
          %s2111 = smul.addr %s2110, 32
          %s2112 = scalar_lea.vmem [#allocation15], %s2111
          %2113 = dma.done %s2109, 512
        $region88: #{us_bottleneck_forward.1} parent=83 // pred_fallthru
          _
      $region84: #{us_bottleneck_forward.1} parent=5 // pred_fallthru
        _
    $region6: #{us_bottleneck_forward.1} parent=1 // loop_footer
      %s26 = sadd.s32 1, %s22
    $region7: #{us_bottleneck_forward.1} parent=1 // loop_footer_branch
      %21 = sbr.rel target = $region3
    $region8: #{us_bottleneck_forward.1} parent=1 // loop_exit
      _
    %2114 = vsyncpa [#allocation4], 1
    %s2115 = scalar_lea.sflag [#allocation4], 1
    %2116 = vsyncpa %s2115, 1
    %2117 = vsyncpa [#allocation7], 1
    %2118 = vsyncpa [#allocation10], 1
    %2119 = vsyncpa [#allocation13], 1
    %2120 = vsyncpa [#allocation5], 1
    %s2121 = scalar_lea.sflag [#allocation5], 1
    %2122 = vsyncpa %s2121, 1

</llo_original>
